<compile_context>
chip_gen: v7x
topology: tpu7x:2x2x1
jax: 0.10.0
libtpu: 0.0.40
codegen_flags: <defaults>
</compile_context>

<pallas_src>
import functools
import math

import jax
import jax.numpy as jnp
from jax import lax
from jax.experimental import pallas as pl
from jax.experimental.pallas import tpu as pltpu

LANE = 128


def _round_up(x, m):
    return ((x + m - 1) // m) * m


def _pick_tile_rows(total_rows, row_bytes, target_bytes=4 << 20, max_rows=1024):
    """Largest divisor of total_rows that is a multiple of 8, bounded by a
    per-buffer VMEM budget (v7x-safe). Falls back to the full extent."""
    cap = max(8, min(max_rows, target_bytes // max(row_bytes, 1)))
    best = None
    t = 8
    lim = min(cap, total_rows)
    while t <= lim:
        if total_rows % t == 0:
            best = t
        t += 8
    return best if best is not None else total_rows


# ---------------------------------------------------------------------------
# Single fused kernel: grid over B*T row-tiles of data2; video-transformer
# branch computed once on the final grid step.
# ---------------------------------------------------------------------------
def _unified_kernel(x1_ref, x11_ref, w_in1_ref, w_in2_ref, b_in_ref,
                    wq_ref, wk_ref, wv_ref, w_out_ref, b_out_ref,
                    lens_ref,
                    x2_ref, w1_ref, b1_ref, w2_ref, b2_ref,
                    out_vt_ref, out_st_ref,
                    acc_ref,
                    *, B, S, T, tile_rows):
    f32 = jnp.float32
    step = pl.program_id(0)
    nsteps = pl.num_programs(0)

    # ---------------- spatiotemporal branch: one (tile_rows, C*HW) tile -----
    @pl.when(step == 0)
    def _():
        acc_ref[...] = jnp.zeros_like(acc_ref)

    # cast the f32 tile to bf16 in VMEM (VPU, cheap) right before the MXU
    x2 = x2_ref[...].astype(jnp.bfloat16)                         # (tile_rows, C*HW)
    hh = jnp.dot(x2, w1_ref[...], preferred_element_type=f32) + b1_ref[...]
    hh = jnp.maximum(hh, 0.0)                                     # (tile_rows, HdP)

    # length-masked temporal mean as a small MXU matmul; mask built with
    # bound comparisons only (no // or % by T).
    lens = lens_ref[...]                                          # (B, 1) int32
    row_g = step * tile_rows + lax.broadcasted_iota(jnp.int32, (B, tile_rows), 1)
    start = lax.broadcasted_iota(jnp.int32, (B, tile_rows), 0) * T
    stop = start + jnp.minimum(lens, T)
    valid = (row_g >= start) & (row_g < stop)                     # (B, tile_rows)
    inv_len = 1.0 / jnp.maximum(lens.astype(f32), 1.0)            # (B, 1) exact
    pool = valid.astype(f32) * inv_len                            # (B, tile_rows)
    acc_ref[...] += jnp.dot(pool, hh, preferred_element_type=f32) # (B, HdP)

    # ---------------- finalize + video-transformer branch (last step) -------
    @pl.when(step == nsteps - 1)
    def _():
        out_st_ref[...] = (jnp.dot(acc_ref[...], w2_ref[...],
                                   preferred_element_type=f32) + b2_ref[...])

        # two-stream projection (two dots summed; no wrapper concat)
        h2 = jnp.tanh(
            jnp.dot(x1_ref[...], w_in1_ref[...], preferred_element_type=f32)
            + jnp.dot(x11_ref[...], w_in2_ref[...], preferred_element_type=f32)
            + b_in_ref[...])                                      # (B*S, HP)

        # attention scale is pre-folded into w_q
        q = jnp.dot(h2, wq_ref[...], preferred_element_type=f32).reshape(B, S, -1)
        k = jnp.dot(h2, wk_ref[...], preferred_element_type=f32).reshape(B, S, -1)
        v = jnp.dot(h2, wv_ref[...], preferred_element_type=f32).reshape(B, S, -1)

        # true batched attention: no (B*S, B*S) score matrix, no masking
        s = jnp.einsum("bqh,bkh->bqk", q, k, preferred_element_type=f32)
        s = s - jnp.max(s, axis=-1, keepdims=True)
        p = jnp.exp(s)
        p = p * pl.reciprocal(jnp.sum(p, axis=-1, keepdims=True), approx=True)
        attn = jnp.einsum("bqk,bkh->bqh", p, v, preferred_element_type=f32)

        pooled = jnp.sum(attn, axis=1) * (1.0 / S)                # (B, HP)
        out_vt_ref[...] = (jnp.dot(pooled, w_out_ref[...],
                                   preferred_element_type=f32) + b_out_ref[...])


# ---------------------------------------------------------------------------
# One-time weight fusion / padding (hoisted out of the per-call forward path)
# ---------------------------------------------------------------------------
def prepare_params(vt_params, st_params, HW):
    f32 = jnp.float32
    D, H = vt_params["w_in1"].shape
    O1 = vt_params["w_out"].shape[1]
    C, Hd = st_params["w1"].shape
    O2 = st_params["w2"].shape[1]

    HP = max(LANE, _round_up(H, LANE))
    HdP = max(LANE, _round_up(Hd, LANE))
    O1P = max(LANE, _round_up(O1, LANE))
    O2P = max(LANE, _round_up(O2, LANE))

    def pad(a, rows, cols):
        out = jnp.zeros((rows, cols), f32)
        return out.at[: a.shape[0], : a.shape[1]].set(a.astype(f32))

    scale = 1.0 / math.sqrt(H)                                    # attention scale
    w1_fused = jnp.repeat(st_params["w1"].astype(f32), HW, axis=0) / float(HW)

    return {
        # video-transformer branch (hidden dims padded to lane width)
        "w_in1": pad(vt_params["w_in1"], D, HP),
        "w_in2": pad(vt_params["w_in2"], D, HP),
        "b_in":  pad(vt_params["b_in"], 1, HP),
        "w_q":   pad(vt_params["w_q"] * scale, HP, HP),
        "w_k":   pad(vt_params["w_k"], HP, HP),
        "w_v":   pad(vt_params["w_v"], HP, HP),
        "w_out": pad(vt_params["w_out"], HP, O1P),
        "b_out": pad(vt_params["b_out"], 1, O1P),
        # spatiotemporal branch (spatial mean folded into w1; bf16 MXU operand)
        "w1": pad(w1_fused, C * HW, HdP).astype(jnp.bfloat16),
        "b1": pad(st_params["b1"], 1, HdP),
        "w2": pad(st_params["w2"], HdP, O2P),
        "b2": pad(st_params["b2"], 1, O2P),
    }


# ---------------------------------------------------------------------------
# UnifiedModel forward
# ---------------------------------------------------------------------------
@functools.partial(jax.jit, static_argnames=("out_dims", "tile_rows"))
def unified_model_forward(data1, data11, data2, length, prepared, *,
                          out_dims, tile_rows=None):
    B, S, D = data1.shape
    _, T, C, Hs, Ws = data2.shape
    CHW = C * Hs * Ws
    BT = B * T
    O1, O2 = out_dims

    HdP = prepared["w1"].shape[1]
    O1P = prepared["w_out"].shape[1]
    O2P = prepared["w2"].shape[1]
    assert prepared["w1"].shape[0] == CHW, "prepared params don't match data2 spatial size"

    if tile_rows is None:
        tile_rows = _pick_tile_rows(BT, CHW * 4)
    assert BT % tile_rows == 0, "tile_rows must divide B*T"
    n_steps = BT // tile_rows

    # free, contiguous reshapes only (no concat / repeat / dtype casts here)
    x1 = data1.reshape(B * S, D)
    x11 = data11.reshape(B * S, D)
    x2 = data2.reshape(BT, CHW)
    lens = length.reshape(B, 1).astype(jnp.int32)

    def const_spec(a):
        zeros = (0,) * a.ndim
        return pl.BlockSpec(tuple(a.shape), lambda i: zeros)

    in_specs = [
        const_spec(x1), const_spec(x11),
        const_spec(prepared["w_in1"]), const_spec(prepared["w_in2"]),
        const_spec(prepared["b_in"]),
        const_spec(prepared["w_q"]), const_spec(prepared["w_k"]),
        const_spec(prepared["w_v"]),
        const_spec(prepared["w_out"]), const_spec(prepared["b_out"]),
        const_spec(lens),
        pl.BlockSpec((tile_rows, CHW), lambda i: (i, 0)),          # pipelined x2 tiles
        const_spec(prepared["w1"]), const_spec(prepared["b1"]),
        const_spec(prepared["w2"]), const_spec(prepared["b2"]),
    ]
    out_specs = (pl.BlockSpec((B, O1P), lambda i: (0, 0)),
                 pl.BlockSpec((B, O2P), lambda i: (0, 0)))

    def nbytes(a):
        return int(a.size) * a.dtype.itemsize

    small = sum(nbytes(a) for a in (
        x1, x11, lens,
        prepared["w_in1"], prepared["w_in2"], prepared["b_in"],
        prepared["w_q"], prepared["w_k"], prepared["w_v"],
        prepared["w_out"], prepared["b_out"],
        prepared["w1"], prepared["b1"], prepared["w2"], prepared["b2"]))
    est = (2 * tile_rows * CHW * 4        # double-buffered x2 tiles
           + 2 * small                    # other inputs (conservative)
           + 2 * (B * O1P + B * O2P) * 4  # outputs
           + B * HdP * 4)                 # accumulator scratch
    vmem_limit = int(min(max(2 * est, 32 << 20), 100 << 20))

    kernel = functools.partial(_unified_kernel, B=B, S=S, T=T, tile_rows=tile_rows)

    out_vt, out_st = pl.pallas_call(
        kernel,
        out_shape=(jax.ShapeDtypeStruct((B, O1P), jnp.float32),
                   jax.ShapeDtypeStruct((B, O2P), jnp.float32)),
        grid_spec=pltpu.PrefetchScalarGridSpec(
            num_scalar_prefetch=0,
            grid=(n_steps,),
            in_specs=in_specs,
            out_specs=out_specs,
            scratch_shapes=[pltpu.VMEM((B, HdP), jnp.float32)],
        ),
        compiler_params=pltpu.CompilerParams(
            dimension_semantics=("arbitrary",),   # B*T axis carries the accumulator
            vmem_limit_bytes=vmem_limit,
        ),
    )(x1, x11,
      prepared["w_in1"], prepared["w_in2"], prepared["b_in"],
      prepared["w_q"], prepared["w_k"], prepared["w_v"],
      prepared["w_out"], prepared["b_out"],
      lens,
      x2, prepared["w1"], prepared["b1"], prepared["w2"], prepared["b2"])

    return out_vt[:, :O1], out_st[:, :O2]


# ---------------------------------------------------------------------------
# Pure-JAX reference (f32 everywhere) for a correctness check
# ---------------------------------------------------------------------------
def reference_forward(data1, data11, data2, length, vt, st):
    h = jnp.tanh(data1 @ vt["w_in1"] + data11 @ vt["w_in2"] + vt["b_in"])
    q = h @ vt["w_q"]
    k = h @ vt["w_k"]
    v = h @ vt["w_v"]
    s = jnp.einsum("bqh,bkh->bqk", q, k) / jnp.sqrt(jnp.float32(h.shape[-1]))
    p = jax.nn.softmax(s, axis=-1)
    attn = jnp.einsum("bqk,bkh->bqh", p, v)
    out = attn.mean(axis=1) @ vt["w_out"] + vt["b_out"]

    B, T, C, Hs, Ws = data2.shape
    sp = data2.reshape(B, T, C, Hs * Ws).mean(axis=-1)            # (B, T, C)
    hh = jax.nn.relu(sp @ st["w1"] + st["b1"])                    # (B, T, Hd)
    mask = (jnp.arange(T)[None, :, None] < length[:, None, None]).astype(jnp.float32)
    denom = jnp.maximum(length.astype(jnp.float32), 1.0)[:, None]
    pooled_t = (hh * mask).sum(axis=1) / denom
    out1 = pooled_t @ st["w2"] + st["b2"]
    return out, out1


def init_params(key, D, H, O1, C, Hd, O2):
    ks = jax.random.split(key, 12)
    sc = 0.1
    vt_params = {
        "w_in1": sc * jax.random.normal(ks[0], (D, H), jnp.float32),
        "w_in2": sc * jax.random.normal(ks[1], (D, H), jnp.float32),
        "b_in":  sc * jax.random.normal(ks[2], (1, H), jnp.float32),
        "w_q":   sc * jax.random.normal(ks[3], (H, H), jnp.float32),
        "w_k":   sc * jax.random.normal(ks[4], (H, H), jnp.float32),
        "w_v":   sc * jax.random.normal(ks[5], (H, H), jnp.float32),
        "w_out": sc * jax.random.normal(ks[6], (H, O1), jnp.float32),
        "b_out": sc * jax.random.normal(ks[7], (1, O1), jnp.float32),
    }
    st_params = {
        "w1": sc * jax.random.normal(ks[8], (C, Hd), jnp.float32),
        "b1": sc * jax.random.normal(ks[9], (1, Hd), jnp.float32),
        "w2": sc * jax.random.normal(ks[10], (Hd, O2), jnp.float32),
        "b2": sc * jax.random.normal(ks[11], (1, O2), jnp.float32),
    }
    return vt_params, st_params


if __name__ == "__main__":
    # small shapes consistent with the forward signature
    B, S, D = 2, 8, 32            # video_transformer streams
    T, C, Hs, Ws = 8, 4, 16, 16   # spatiotemporal video (NCHW per frame)
    H, O1, Hd, O2 = 32, 16, 32, 16

    key = jax.random.PRNGKey(0)
    k1, k2, k3, kp = jax.random.split(key, 4)

    data1 = jax.random.normal(k1, (B, S, D), jnp.float32)
    data11 = jax.random.normal(k2, (B, S, D), jnp.float32)
    data2 = jax.random.normal(k3, (B, T, C, Hs, Ws), jnp.float32)
    length = jnp.array([5, 8], dtype=jnp.int32)

    vt_params, st_params = init_params(kp, D, H, O1, C, Hd, O2)
    prepared = prepare_params(vt_params, st_params, HW=Hs * Ws)

    # tile_rows=8 forces a 2-step grid here to exercise the pipelined path;
    # default (None) auto-picks ~4 MiB tiles at production shapes.
    output, output1 = unified_model_forward(
        data1, data11, data2, length, prepared,
        out_dims=(O1, O2), tile_rows=8)
    jax.block_until_ready((output, output1))

    assert output.shape == (B, O1) and output1.shape == (B, O2)
    assert jnp.all(jnp.isfinite(output)) and jnp.all(jnp.isfinite(output1))

    # correctness vs f32 pure-JAX reference (bf16 data2 matmul + approx
    # softmax reciprocal introduce only small deviations)
    ref_out, ref_out1 = reference_forward(
        data1, data11, data2, length, vt_params, st_params)
    assert jnp.allclose(output, ref_out, rtol=2e-2, atol=2e-2)
    assert jnp.allclose(output1, ref_out1, rtol=2e-2, atol=2e-2)

    print("KERNEL_OK")
</pallas_src>

<mosaic_0001>
module attributes {stable_mosaic.version = 11 : i64} {
  func.func @_unified_kernel(%arg0: i32, %arg1: memref<16x32xf32, #tpu.memory_space<vmem>>, %arg2: memref<16x32xf32, #tpu.memory_space<vmem>>, %arg3: memref<32x128xf32, #tpu.memory_space<vmem>>, %arg4: memref<32x128xf32, #tpu.memory_space<vmem>>, %arg5: memref<1x128xf32, #tpu.memory_space<vmem>>, %arg6: memref<128x128xf32, #tpu.memory_space<vmem>>, %arg7: memref<128x128xf32, #tpu.memory_space<vmem>>, %arg8: memref<128x128xf32, #tpu.memory_space<vmem>>, %arg9: memref<128x128xf32, #tpu.memory_space<vmem>>, %arg10: memref<1x128xf32, #tpu.memory_space<vmem>>, %arg11: memref<2x1xi32, #tpu.memory_space<vmem>>, %arg12: memref<8x1024xf32, #tpu.memory_space<vmem>>, %arg13: memref<1024x128xbf16, #tpu.memory_space<vmem>>, %arg14: memref<1x128xf32, #tpu.memory_space<vmem>>, %arg15: memref<128x128xf32, #tpu.memory_space<vmem>>, %arg16: memref<1x128xf32, #tpu.memory_space<vmem>>, %arg17: memref<2x128xf32, #tpu.memory_space<vmem>>, %arg18: memref<2x128xf32, #tpu.memory_space<vmem>>, %arg19: memref<2x128xf32, #tpu.memory_space<vmem>>) attributes {dimension_semantics = [#tpu.dimension_semantics<arbitrary>], iteration_bounds = array<i64: 2>, scalar_prefetch = 0 : i64, scratch_operands = 1 : i64, tpu.core_type = #tpu.core_type<tc>, window_params = [{pipeline_mode = #tpu.pipeline_mode<synchronous>, transform_indices = @transform_0, window_bounds = array<i64: 16, 32>}, {pipeline_mode = #tpu.pipeline_mode<synchronous>, transform_indices = @transform_1, window_bounds = array<i64: 16, 32>}, {pipeline_mode = #tpu.pipeline_mode<synchronous>, transform_indices = @transform_2, window_bounds = array<i64: 32, 128>}, {pipeline_mode = #tpu.pipeline_mode<synchronous>, transform_indices = @transform_3, window_bounds = array<i64: 32, 128>}, {pipeline_mode = #tpu.pipeline_mode<synchronous>, transform_indices = @transform_4, window_bounds = array<i64: 1, 128>}, {pipeline_mode = #tpu.pipeline_mode<synchronous>, transform_indices = @transform_5, window_bounds = array<i64: 128, 128>}, {pipeline_mode = #tpu.pipeline_mode<synchronous>, transform_indices = @transform_6, window_bounds = array<i64: 128, 128>}, {pipeline_mode = #tpu.pipeline_mode<synchronous>, transform_indices = @transform_7, window_bounds = array<i64: 128, 128>}, {pipeline_mode = #tpu.pipeline_mode<synchronous>, transform_indices = @transform_8, window_bounds = array<i64: 128, 128>}, {pipeline_mode = #tpu.pipeline_mode<synchronous>, transform_indices = @transform_9, window_bounds = array<i64: 1, 128>}, {pipeline_mode = #tpu.pipeline_mode<synchronous>, transform_indices = @transform_10, window_bounds = array<i64: 2, 1>}, {transform_indices = @transform_11, window_bounds = array<i64: 8, 1024>}, {pipeline_mode = #tpu.pipeline_mode<synchronous>, transform_indices = @transform_12, window_bounds = array<i64: 1024, 128>}, {pipeline_mode = #tpu.pipeline_mode<synchronous>, transform_indices = @transform_13, window_bounds = array<i64: 1, 128>}, {pipeline_mode = #tpu.pipeline_mode<synchronous>, transform_indices = @transform_14, window_bounds = array<i64: 128, 128>}, {pipeline_mode = #tpu.pipeline_mode<synchronous>, transform_indices = @transform_15, window_bounds = array<i64: 1, 128>}, {pipeline_mode = #tpu.pipeline_mode<synchronous>, transform_indices = @transform_16, window_bounds = array<i64: 2, 128>}, {pipeline_mode = #tpu.pipeline_mode<synchronous>, transform_indices = @transform_17, window_bounds = array<i64: 2, 128>}]} {
    %c0_i32 = arith.constant 0 : i32
    %0 = arith.cmpi eq, %arg0, %c0_i32 : i32
    %1 = arith.extui %0 : i1 to i32
    %c0_i32_0 = arith.constant 0 : i32
    %2 = arith.cmpi ne, %1, %c0_i32_0 : i32
    scf.if %2 {
      %cst_19 = arith.constant 0.000000e+00 : f32
      %43 = vector.broadcast %cst_19 : f32 to vector<2x128xf32>
      %c0_20 = arith.constant 0 : index
      %c0_21 = arith.constant 0 : index
      %44 = vector.load %arg19[%c0_20, %c0_21] : memref<2x128xf32, #tpu.memory_space<vmem>>, vector<2x128xf32>
      tpu.vector_store %arg19[%c0_20, %c0_21], %43 {strides = array<i32>} : memref<2x128xf32, #tpu.memory_space<vmem>>, vector<2x128xf32>,
    } else {
    }
    %c0 = arith.constant 0 : index
    %c0_1 = arith.constant 0 : index
    %3 = vector.load %arg12[%c0, %c0_1] : memref<8x1024xf32, #tpu.memory_space<vmem>>, vector<8x1024xf32>
    %4 = arith.truncf %3 : vector<8x1024xf32> to vector<8x1024xbf16>
    %c0_2 = arith.constant 0 : index
    %c0_3 = arith.constant 0 : index
    %5 = vector.load %arg13[%c0_2, %c0_3] : memref<1024x128xbf16, #tpu.memory_space<vmem>>, vector<1024x128xbf16>
    %cst = arith.constant dense<0.000000e+00> : vector<8x128xf32>
    %6 = tpu.matmul %4, %5, %cst {dimension_numbers = #tpu.dot_dimension_numbers<[1], [0], [0], [1], [0, 0, 1, 1], [], []>} : vector<8x1024xbf16>, vector<1024x128xbf16>, vector<8x128xf32> -> vector<8x128xf32>
    %c0_4 = arith.constant 0 : index
    %c0_5 = arith.constant 0 : index
    %7 = vector.load %arg14[%c0_4, %c0_5] : memref<1x128xf32, #tpu.memory_space<vmem>>, vector<1x128xf32>
    %8 = vector.broadcast %7 : vector<1x128xf32> to vector<8x128xf32>
    %9 = arith.addf %6, %8 : vector<8x128xf32>
    %cst_6 = arith.constant 0.000000e+00 : f32
    %10 = vector.broadcast %cst_6 : f32 to vector<8x128xf32>
    %11 = arith.maximumf %9, %10 : vector<8x128xf32>
    %c0_7 = arith.constant 0 : index
    %c0_8 = arith.constant 0 : index
    %12 = vector.load %arg11[%c0_7, %c0_8] : memref<2x1xi32, #tpu.memory_space<vmem>>, vector<2x1xi32>
    %c8_i32 = arith.constant 8 : i32
    %13 = arith.muli %arg0, %c8_i32 : i32
    %14 = tpu.iota {dimensions = array<i32: 1>} : vector<2x8xi32>
    %15 = vector.broadcast %13 : i32 to vector<2x8xi32>
    %16 = arith.addi %15, %14 : vector<2x8xi32>
    %17 = tpu.iota {dimensions = array<i32: 0>} : vector<2x8xi32>
    %c8_i32_9 = arith.constant 8 : i32
    %18 = vector.broadcast %c8_i32_9 : i32 to vector<2x8xi32>
    %19 = arith.muli %17, %18 : vector<2x8xi32>
    %c8_i32_10 = arith.constant 8 : i32
    %20 = vector.broadcast %c8_i32_10 : i32 to vector<2x1xi32>
    %21 = arith.minsi %12, %20 : vector<2x1xi32>
    %22 = vector.broadcast %21 : vector<2x1xi32> to vector<2x8xi32>
    %23 = arith.addi %19, %22 : vector<2x8xi32>
    %24 = arith.cmpi sge, %16, %19 : vector<2x8xi32>
    %25 = arith.cmpi slt, %16, %23 : vector<2x8xi32>
    %26 = arith.andi %24, %25 : vector<2x8xi1>
    %27 = arith.sitofp %12 : vector<2x1xi32> to vector<2x1xf32>
    %cst_11 = arith.constant 1.000000e+00 : f32
    %28 = vector.broadcast %cst_11 : f32 to vector<2x1xf32>
    %29 = arith.maximumf %27, %28 : vector<2x1xf32>
    %cst_12 = arith.constant 1.000000e+00 : f32
    %30 = vector.broadcast %cst_12 : f32 to vector<2x1xf32>
    %31 = arith.divf %30, %29 : vector<2x1xf32>
    %32 = arith.extui %26 : vector<2x8xi1> to vector<2x8xi32>
    %33 = arith.sitofp %32 : vector<2x8xi32> to vector<2x8xf32>
    %34 = vector.broadcast %31 : vector<2x1xf32> to vector<2x8xf32>
    %35 = arith.mulf %33, %34 : vector<2x8xf32>
    %c0_13 = arith.constant 0 : index
    %c0_14 = arith.constant 0 : index
    %36 = vector.load %arg19[%c0_13, %c0_14] : memref<2x128xf32, #tpu.memory_space<vmem>>, vector<2x128xf32>
    %cst_15 = arith.constant dense<0.000000e+00> : vector<2x128xf32>
    %37 = tpu.matmul %35, %11, %cst_15 {dimension_numbers = #tpu.dot_dimension_numbers<[1], [0], [0], [1], [0, 0, 1, 1], [], []>} : vector<2x8xf32>, vector<8x128xf32>, vector<2x128xf32> -> vector<2x128xf32>
    %38 = arith.addf %36, %37 : vector<2x128xf32>
    %c0_16 = arith.constant 0 : index
    %c0_17 = arith.constant 0 : index
    %39 = vector.load %arg19[%c0_16, %c0_17] : memref<2x128xf32, #tpu.memory_space<vmem>>, vector<2x128xf32>
    tpu.vector_store %arg19[%c0_16, %c0_17], %38 {strides = array<i32>} : memref<2x128xf32, #tpu.memory_space<vmem>>, vector<2x128xf32>,
    %c1_i32 = arith.constant 1 : i32
    %40 = arith.cmpi eq, %arg0, %c1_i32 : i32
    %41 = arith.extui %40 : i1 to i32
    %c0_i32_18 = arith.constant 0 : i32
    %42 = arith.cmpi ne, %41, %c0_i32_18 : i32
    scf.if %42 {
      %c0_19 = arith.constant 0 : index
      %c0_20 = arith.constant 0 : index
      %43 = vector.load %arg19[%c0_19, %c0_20] : memref<2x128xf32, #tpu.memory_space<vmem>>, vector<2x128xf32>
      %c0_21 = arith.constant 0 : index
      %c0_22 = arith.constant 0 : index
      %44 = vector.load %arg15[%c0_21, %c0_22] : memref<128x128xf32, #tpu.memory_space<vmem>>, vector<128x128xf32>
      %cst_23 = arith.constant dense<0.000000e+00> : vector<2x128xf32>
      %45 = tpu.matmul %43, %44, %cst_23 {dimension_numbers = #tpu.dot_dimension_numbers<[1], [0], [0], [1], [0, 0, 1, 1], [], []>} : vector<2x128xf32>, vector<128x128xf32>, vector<2x128xf32> -> vector<2x128xf32>
      %c0_24 = arith.constant 0 : index
      %c0_25 = arith.constant 0 : index
      %46 = vector.load %arg16[%c0_24, %c0_25] : memref<1x128xf32, #tpu.memory_space<vmem>>, vector<1x128xf32>
      %47 = vector.broadcast %46 : vector<1x128xf32> to vector<2x128xf32>
      %48 = arith.addf %45, %47 : vector<2x128xf32>
      %c0_26 = arith.constant 0 : index
      %c0_27 = arith.constant 0 : index
      %49 = vector.load %arg18[%c0_26, %c0_27] : memref<2x128xf32, #tpu.memory_space<vmem>>, vector<2x128xf32>
      tpu.vector_store %arg18[%c0_26, %c0_27], %48 {strides = array<i32>} : memref<2x128xf32, #tpu.memory_space<vmem>>, vector<2x128xf32>,
      %c0_28 = arith.constant 0 : index
      %c0_29 = arith.constant 0 : index
      %50 = vector.load %arg1[%c0_28, %c0_29] : memref<16x32xf32, #tpu.memory_space<vmem>>, vector<16x32xf32>
      %c0_30 = arith.constant 0 : index
      %c0_31 = arith.constant 0 : index
      %51 = vector.load %arg3[%c0_30, %c0_31] : memref<32x128xf32, #tpu.memory_space<vmem>>, vector<32x128xf32>
      %cst_32 = arith.constant dense<0.000000e+00> : vector<16x128xf32>
      %52 = tpu.matmul %50, %51, %cst_32 {dimension_numbers = #tpu.dot_dimension_numbers<[1], [0], [0], [1], [0, 0, 1, 1], [], []>} : vector<16x32xf32>, vector<32x128xf32>, vector<16x128xf32> -> vector<16x128xf32>
      %c0_33 = arith.constant 0 : index
      %c0_34 = arith.constant 0 : index
      %53 = vector.load %arg2[%c0_33, %c0_34] : memref<16x32xf32, #tpu.memory_space<vmem>>, vector<16x32xf32>
      %c0_35 = arith.constant 0 : index
      %c0_36 = arith.constant 0 : index
      %54 = vector.load %arg4[%c0_35, %c0_36] : memref<32x128xf32, #tpu.memory_space<vmem>>, vector<32x128xf32>
      %cst_37 = arith.constant dense<0.000000e+00> : vector<16x128xf32>
      %55 = tpu.matmul %53, %54, %cst_37 {dimension_numbers = #tpu.dot_dimension_numbers<[1], [0], [0], [1], [0, 0, 1, 1], [], []>} : vector<16x32xf32>, vector<32x128xf32>, vector<16x128xf32> -> vector<16x128xf32>
      %56 = arith.addf %52, %55 : vector<16x128xf32>
      %c0_38 = arith.constant 0 : index
      %c0_39 = arith.constant 0 : index
      %57 = vector.load %arg5[%c0_38, %c0_39] : memref<1x128xf32, #tpu.memory_space<vmem>>, vector<1x128xf32>
      %58 = vector.broadcast %57 : vector<1x128xf32> to vector<16x128xf32>
      %59 = arith.addf %56, %58 : vector<16x128xf32>
      %60 = math.tanh %59 : vector<16x128xf32>
      %c0_40 = arith.constant 0 : index
      %c0_41 = arith.constant 0 : index
      %61 = vector.load %arg6[%c0_40, %c0_41] : memref<128x128xf32, #tpu.memory_space<vmem>>, vector<128x128xf32>
      %cst_42 = arith.constant dense<0.000000e+00> : vector<16x128xf32>
      %62 = tpu.matmul %60, %61, %cst_42 {dimension_numbers = #tpu.dot_dimension_numbers<[1], [0], [0], [1], [0, 0, 1, 1], [], []>} : vector<16x128xf32>, vector<128x128xf32>, vector<16x128xf32> -> vector<16x128xf32>
      %63 = vector.shape_cast %62 : vector<16x128xf32> to vector<2x8x128xf32>
      %c0_43 = arith.constant 0 : index
      %c0_44 = arith.constant 0 : index
      %64 = vector.load %arg7[%c0_43, %c0_44] : memref<128x128xf32, #tpu.memory_space<vmem>>, vector<128x128xf32>
      %cst_45 = arith.constant dense<0.000000e+00> : vector<16x128xf32>
      %65 = tpu.matmul %60, %64, %cst_45 {dimension_numbers = #tpu.dot_dimension_numbers<[1], [0], [0], [1], [0, 0, 1, 1], [], []>} : vector<16x128xf32>, vector<128x128xf32>, vector<16x128xf32> -> vector<16x128xf32>
      %66 = vector.shape_cast %65 : vector<16x128xf32> to vector<2x8x128xf32>
      %c0_46 = arith.constant 0 : index
      %c0_47 = arith.constant 0 : index
      %67 = vector.load %arg8[%c0_46, %c0_47] : memref<128x128xf32, #tpu.memory_space<vmem>>, vector<128x128xf32>
      %cst_48 = arith.constant dense<0.000000e+00> : vector<16x128xf32>
      %68 = tpu.matmul %60, %67, %cst_48 {dimension_numbers = #tpu.dot_dimension_numbers<[1], [0], [0], [1], [0, 0, 1, 1], [], []>} : vector<16x128xf32>, vector<128x128xf32>, vector<16x128xf32> -> vector<16x128xf32>
      %69 = vector.shape_cast %68 : vector<16x128xf32> to vector<2x8x128xf32>
      "tpu.trace_start"() <{level = 10 : i32, message = "bqh,bkh->bqk"}> : () -> ()
      %cst_49 = arith.constant dense<0.000000e+00> : vector<2x8x8xf32>
      %70 = tpu.matmul %63, %66, %cst_49 {dimension_numbers = #tpu.dot_dimension_numbers<[2], [2], [1], [1], [0, 0, 0, 1, 1, 1], [0], [0]>} : vector<2x8x128xf32>, vector<2x8x128xf32>, vector<2x8x8xf32> -> vector<2x8x8xf32>
      "tpu.trace_stop"() : () -> ()
      %cst_50 = arith.constant dense<0xFF800000> : vector<2x8xf32>
      %71 = vector.multi_reduction <maximumf>, %70, %cst_50 [2] : vector<2x8x8xf32> to vector<2x8xf32>
      %72 = vector.shape_cast %71 : vector<2x8xf32> to vector<2x8x1xf32>
      %73 = vector.broadcast %72 : vector<2x8x1xf32> to vector<2x8x8xf32>
      %74 = arith.subf %70, %73 : vector<2x8x8xf32>
      %75 = math.exp %74 : vector<2x8x8xf32>
      %cst_51 = arith.constant dense<0.000000e+00> : vector<2x8xf32>
      %76 = vector.multi_reduction <add>, %75, %cst_51 [2] : vector<2x8x8xf32> to vector<2x8xf32>
      %77 = vector.shape_cast %76 : vector<2x8xf32> to vector<2x8x1xf32>
      %78 = tpu.reciprocal %77 {approx = true} : vector<2x8x1xf32> -> vector<2x8x1xf32>
      %79 = vector.broadcast %78 : vector<2x8x1xf32> to vector<2x8x8xf32>
      %80 = arith.mulf %75, %79 : vector<2x8x8xf32>
      "tpu.trace_start"() <{level = 10 : i32, message = "bqk,bkh->bqh"}> : () -> ()
      %cst_52 = arith.constant dense<0.000000e+00> : vector<2x8x128xf32>
      %81 = tpu.matmul %80, %69, %cst_52 {dimension_numbers = #tpu.dot_dimension_numbers<[2], [1], [1], [2], [0, 0, 0, 1, 1, 2], [0], [0]>} : vector<2x8x8xf32>, vector<2x8x128xf32>, vector<2x8x128xf32> -> vector<2x8x128xf32>
      "tpu.trace_stop"() : () -> ()
      %cst_53 = arith.constant dense<0.000000e+00> : vector<2x128xf32>
      %82 = vector.multi_reduction <add>, %81, %cst_53 [1] : vector<2x8x128xf32> to vector<2x128xf32>
      %cst_54 = arith.constant 1.250000e-01 : f32
      %83 = vector.broadcast %cst_54 : f32 to vector<2x128xf32>
      %84 = arith.mulf %82, %83 : vector<2x128xf32>
      %c0_55 = arith.constant 0 : index
      %c0_56 = arith.constant 0 : index
      %85 = vector.load %arg9[%c0_55, %c0_56] : memref<128x128xf32, #tpu.memory_space<vmem>>, vector<128x128xf32>
      %cst_57 = arith.constant dense<0.000000e+00> : vector<2x128xf32>
      %86 = tpu.matmul %84, %85, %cst_57 {dimension_numbers = #tpu.dot_dimension_numbers<[1], [0], [0], [1], [0, 0, 1, 1], [], []>} : vector<2x128xf32>, vector<128x128xf32>, vector<2x128xf32> -> vector<2x128xf32>
      %c0_58 = arith.constant 0 : index
      %c0_59 = arith.constant 0 : index
      %87 = vector.load %arg10[%c0_58, %c0_59] : memref<1x128xf32, #tpu.memory_space<vmem>>, vector<1x128xf32>
      %88 = vector.broadcast %87 : vector<1x128xf32> to vector<2x128xf32>
      %89 = arith.addf %86, %88 : vector<2x128xf32>
      %c0_60 = arith.constant 0 : index
      %c0_61 = arith.constant 0 : index
      %90 = vector.load %arg17[%c0_60, %c0_61] : memref<2x128xf32, #tpu.memory_space<vmem>>, vector<2x128xf32>
      tpu.vector_store %arg17[%c0_60, %c0_61], %89 {strides = array<i32>} : memref<2x128xf32, #tpu.memory_space<vmem>>, vector<2x128xf32>,
    } else {
    }
    return
  }
  func.func @transform_0(%arg0: i32) -> (i32, i32) {
    %c0_i32 = arith.constant 0 : i32
    %c0_i32_0 = arith.constant 0 : i32
    %c0_i32_1 = arith.constant 0 : i32
    return %c0_i32, %c0_i32_0 : i32, i32
  }
  func.func @transform_1(%arg0: i32) -> (i32, i32) {
    %c0_i32 = arith.constant 0 : i32
    %c0_i32_0 = arith.constant 0 : i32
    %c0_i32_1 = arith.constant 0 : i32
    return %c0_i32, %c0_i32_0 : i32, i32
  }
  func.func @transform_2(%arg0: i32) -> (i32, i32) {
    %c0_i32 = arith.constant 0 : i32
    %c0_i32_0 = arith.constant 0 : i32
    %c0_i32_1 = arith.constant 0 : i32
    return %c0_i32, %c0_i32_0 : i32, i32
  }
  func.func @transform_3(%arg0: i32) -> (i32, i32) {
    %c0_i32 = arith.constant 0 : i32
    %c0_i32_0 = arith.constant 0 : i32
    %c0_i32_1 = arith.constant 0 : i32
    return %c0_i32, %c0_i32_0 : i32, i32
  }
  func.func @transform_4(%arg0: i32) -> (i32, i32) {
    %c0_i32 = arith.constant 0 : i32
    %c0_i32_0 = arith.constant 0 : i32
    %c0_i32_1 = arith.constant 0 : i32
    return %c0_i32, %c0_i32_0 : i32, i32
  }
  func.func @transform_5(%arg0: i32) -> (i32, i32) {
    %c0_i32 = arith.constant 0 : i32
    %c0_i32_0 = arith.constant 0 : i32
    %c0_i32_1 = arith.constant 0 : i32
    return %c0_i32, %c0_i32_0 : i32, i32
  }
  func.func @transform_6(%arg0: i32) -> (i32, i32) {
    %c0_i32 = arith.constant 0 : i32
    %c0_i32_0 = arith.constant 0 : i32
    %c0_i32_1 = arith.constant 0 : i32
    return %c0_i32, %c0_i32_0 : i32, i32
  }
  func.func @transform_7(%arg0: i32) -> (i32, i32) {
    %c0_i32 = arith.constant 0 : i32
    %c0_i32_0 = arith.constant 0 : i32
    %c0_i32_1 = arith.constant 0 : i32
    return %c0_i32, %c0_i32_0 : i32, i32
  }
  func.func @transform_8(%arg0: i32) -> (i32, i32) {
    %c0_i32 = arith.constant 0 : i32
    %c0_i32_0 = arith.constant 0 : i32
    %c0_i32_1 = arith.constant 0 : i32
    return %c0_i32, %c0_i32_0 : i32, i32
  }
  func.func @transform_9(%arg0: i32) -> (i32, i32) {
    %c0_i32 = arith.constant 0 : i32
    %c0_i32_0 = arith.constant 0 : i32
    %c0_i32_1 = arith.constant 0 : i32
    return %c0_i32, %c0_i32_0 : i32, i32
  }
  func.func @transform_10(%arg0: i32) -> (i32, i32) {
    %c0_i32 = arith.constant 0 : i32
    %c0_i32_0 = arith.constant 0 : i32
    %c0_i32_1 = arith.constant 0 : i32
    return %c0_i32, %c0_i32_0 : i32, i32
  }
  func.func @transform_11(%arg0: i32) -> (i32, i32) {
    %c0_i32 = arith.constant 0 : i32
    %c0_i32_0 = arith.constant 0 : i32
    return %arg0, %c0_i32 : i32, i32
  }
  func.func @transform_12(%arg0: i32) -> (i32, i32) {
    %c0_i32 = arith.constant 0 : i32
    %c0_i32_0 = arith.constant 0 : i32
    %c0_i32_1 = arith.constant 0 : i32
    return %c0_i32, %c0_i32_0 : i32, i32
  }
  func.func @transform_13(%arg0: i32) -> (i32, i32) {
    %c0_i32 = arith.constant 0 : i32
    %c0_i32_0 = arith.constant 0 : i32
    %c0_i32_1 = arith.constant 0 : i32
    return %c0_i32, %c0_i32_0 : i32, i32
  }
  func.func @transform_14(%arg0: i32) -> (i32, i32) {
    %c0_i32 = arith.constant 0 : i32
    %c0_i32_0 = arith.constant 0 : i32
    %c0_i32_1 = arith.constant 0 : i32
    return %c0_i32, %c0_i32_0 : i32, i32
  }
  func.func @transform_15(%arg0: i32) -> (i32, i32) {
    %c0_i32 = arith.constant 0 : i32
    %c0_i32_0 = arith.constant 0 : i32
    %c0_i32_1 = arith.constant 0 : i32
    return %c0_i32, %c0_i32_0 : i32, i32
  }
  func.func @transform_16(%arg0: i32) -> (i32, i32) {
    %c0_i32 = arith.constant 0 : i32
    %c0_i32_0 = arith.constant 0 : i32
    %c0_i32_1 = arith.constant 0 : i32
    return %c0_i32, %c0_i32_0 : i32, i32
  }
  func.func @transform_17(%arg0: i32) -> (i32, i32) {
    %c0_i32 = arith.constant 0 : i32
    %c0_i32_0 = arith.constant 0 : i32
    %c0_i32_1 = arith.constant 0 : i32
    return %c0_i32, %c0_i32_0 : i32, i32
  }
}

</mosaic_0001>

<llo_original>
// kernel: unified_model_forward.1
$region0: #{unified_model_forward.1}
  #allocation0 [shape = 'u32[]', space=smem, size = 0x4, offset = 0x4, fixed_abs, tag = 'smem constant byte address 0x4 - core index']
  #allocation1 [shape = 'u32[144,128]{1,0:T(1,128)}', space=vmem, size = 0x12000, scoped, tag = 'internal scratch']
  #allocation2 [shape = 'f32[2,128]{1,0:T(2,128)}', space=vmem, size = 0x400, scoped, tag = 'scratch operand']
  %s0 = inlined_call_operand.hbm [shape: f32[16,32], index: 0, kind: input, shape index: {}]
  %s1 = inlined_call_operand.hbm [shape: f32[16,32], index: 1, kind: input, shape index: {}]
  %s2 = inlined_call_operand.vmem [shape: f32[32,128], index: 2, kind: input, shape index: {}]
  %s3 = inlined_call_operand.hbm [shape: f32[32,128], index: 3, kind: input, shape index: {}]
  %s4 = inlined_call_operand.vmem [shape: f32[1,128], index: 4, kind: input, shape index: {}]
  %s5 = inlined_call_operand.vmem [shape: f32[128,128], index: 5, kind: input, shape index: {}]
  %s6 = inlined_call_operand.vmem [shape: f32[128,128], index: 6, kind: input, shape index: {}]
  %s7 = inlined_call_operand.vmem [shape: f32[128,128], index: 7, kind: input, shape index: {}]
  %s8 = inlined_call_operand.vmem [shape: f32[128,128], index: 8, kind: input, shape index: {}]
  %s9 = inlined_call_operand.vmem [shape: f32[1,128], index: 9, kind: input, shape index: {}]
  %s10 = inlined_call_operand.vmem [shape: s32[2,1], index: 10, kind: input, shape index: {}]
  %s11 = inlined_call_operand.vmem [shape: f32[16,1024], index: 11, kind: input, shape index: {}]
  %s12 = inlined_call_operand.vmem [shape: bf16[1024,128], index: 12, kind: input, shape index: {}]
  %s13 = inlined_call_operand.vmem [shape: f32[1,128], index: 13, kind: input, shape index: {}]
  %s14 = inlined_call_operand.vmem [shape: f32[128,128], index: 14, kind: input, shape index: {}]
  %s15 = inlined_call_operand.vmem [shape: f32[1,128], index: 15, kind: input, shape index: {}]
  %s16 = inlined_call_operand.hbm [shape: f32[2,128], index: 16, kind: output, shape index: {0}]
  %s17 = inlined_call_operand.hbm [shape: f32[2,128], index: 17, kind: output, shape index: {1}]
  %18 = xla_tuple %s16, %s17
  %s19 = sld [smem:[#allocation0]]
  $region125: #{unified_model_forward.1} parent=0
    _
  %s21 = ssub.s32 1, %s19
  %s22 = scalar_select 0, %s21, %s19
  $region1: #{unified_model_forward.1} parent=0
    #allocation3 [shape = 'u8[8192]{0}', space=vmem, size = 0x2000, scoped, tag = 'input window, operand 0, single buffered']
    #allocation4 [shape = 's32[2]{0}', space=sflag, size = 0x8, scoped, tag = 'scoped memory for unified_model_forward.1']
    #allocation5 [shape = 's32[2]{0}', space=sflag, size = 0x8, scoped, tag = 'scoped memory for unified_model_forward.1']
    #allocation6 [shape = 'u8[8192]{0}', space=vmem, size = 0x2000, scoped, tag = 'input window, operand 1, single buffered']
    #allocation7 [shape = 's32[1]{0}', space=sflag, size = 0x4, scoped, tag = 'scoped memory for unified_model_forward.1']
    #allocation8 [shape = 'u8[16384]{0}', space=vmem, size = 0x4000, scoped, tag = 'input window, operand 3, single buffered']
    #allocation9 [shape = 'u8[1024]{0}', space=vmem, size = 0x400, scoped, tag = 'output window, operand 0, single buffered']
    #allocation10 [shape = 'u8[1024]{0}', space=vmem, size = 0x400, scoped, tag = 'output window, operand 1, single buffered']
    #allocation11 [shape = 's32[1]{0}', space=sflag, size = 0x4, scoped, tag = 'scoped memory for unified_model_forward.1']
    %23 = vsyncpa [#allocation4], 0
    %24 = vsyncpa [#allocation7], 0
    %25 = vsyncpa [#allocation5], 0
    %26 = vsyncpa [#allocation11], 0
    loop: start=0, step=1, limit=4
    $region2: #{unified_model_forward.1} parent=1 // loop_pre_header
      _
    $region3: #{unified_model_forward.1} parent=1 // loop_header
      %s28 = sphi 0, %s32
      %p29 = scmp.ge.s32.totalorder %s28, 4
      %s36 = sphi 0, %s36
      %s38 = sphi 0, %s36
      %s39 = sphi 0, %s38
      %s53 = sphi 0, %s39
      %s57 = sphi 0, %s57
      %s59 = sphi 0, %s57
      %s60 = sphi 0, %s59
      %s74 = sphi 0, %s60
      %s78 = sphi 0, %s78
      %s80 = sphi 0, %s78
      %s81 = sphi 0, %s80
      %s95 = sphi 0, %s81
      %s99 = sphi 0, %s99
      %s101 = sphi 0, %s99
      %s102 = sphi 0, %s101
      %s116 = sphi 0, %s102
      %s120 = sphi 0, %s120
      %s122 = sphi 0, %s120
      %s123 = sphi 0, %s122
      %s137 = sphi 0, %s123
      %s141 = sphi 0, %s141
      %s143 = sphi 0, %s141
      %s144 = sphi 0, %s143
      %s158 = sphi 0, %s144
      %s162 = sphi 0, %s162
      %s164 = sphi 0, %s162
      %s165 = sphi 0, %s164
      %s179 = sphi 0, %s165
      %s183 = sphi 0, %s183
      %s185 = sphi 0, %s183
      %s186 = sphi 0, %s185
      %s200 = sphi 0, %s186
      %s204 = sphi 0, %s204
      %s206 = sphi 0, %s204
      %s207 = sphi 0, %s206
      %s221 = sphi 0, %s207
      %s225 = sphi 0, %s225
      %s227 = sphi 0, %s225
      %s228 = sphi 0, %s227
      %s242 = sphi 0, %s228
      %s246 = sphi 0, %s246
      %s248 = sphi 0, %s246
      %s249 = sphi 0, %s248
      %s263 = sphi 0, %s249
      %s269 = sphi 0, %s271
      %s272 = sphi 0, %s269
      %s273 = sphi 0, %s272
      %s289 = sphi 0, %s273
      %s293 = sphi 0, %s293
      %s295 = sphi 0, %s293
      %s296 = sphi 0, %s295
      %s310 = sphi 0, %s296
      %s314 = sphi 0, %s314
      %s316 = sphi 0, %s314
      %s317 = sphi 0, %s316
      %s331 = sphi 0, %s317
      %s335 = sphi 0, %s335
      %s337 = sphi 0, %s335
      %s338 = sphi 0, %s337
      %s352 = sphi 0, %s338
      %s356 = sphi 0, %s356
      %s358 = sphi 0, %s356
      %s359 = sphi 0, %s358
      %s373 = sphi 0, %s359
      %s377 = sphi 0, %s377
      %s379 = sphi 0, %s377
      %s380 = sphi 0, %s379
      %s394 = sphi 0, %s380
      %s398 = sphi 0, %s398
      %s400 = sphi 0, %s398
      %s401 = sphi 0, %s400
      %s415 = sphi 0, %s401
    $region4: #{unified_model_forward.1} parent=1 // loop_header_branch
      %31 = sbr.rel (%p29) target = $region8
    $region5: #{unified_model_forward.1} parent=1 // loop_body
      %s33 = ssub.s32 %s28, 1
      %s34 = ssub.s32 %s28, 2
      %s35 = sadd.s32 %s28, 1
      %s37 = sadd.s32 %s36, 1
      %p40 = scmp.eq.s32.totalorder %s28, 1
      %p41 = scmp.ne.s32.totalorder %s36, %s38
      %p42 = scmp.eq.s32.totalorder %s28, 0
      %p43 = por %p41, %p42
      %p44 = scmp.ne.s32.totalorder %s36, %s38
      %p45 = scmp.eq.s32.totalorder %s33, 1
      %p46 = por %p44, %p45
      %p47 = scmp.ne.s32.totalorder %s38, %s39
      %p48 = scmp.eq.s32.totalorder %s33, 0
      %p49 = por %p47, %p48
      %p50 = scmp.ne.s32.totalorder %s38, %s39
      %p51 = scmp.eq.s32.totalorder %s34, 1
      %p52 = por %p50, %p51
      %p54 = scmp.ne.s32.totalorder %s39, %s53
      %p55 = scmp.eq.s32.totalorder %s34, 0
      %p56 = por %p54, %p55
      %s58 = sadd.s32 %s57, 1
      %p61 = scmp.eq.s32.totalorder %s28, 1
      %p62 = scmp.ne.s32.totalorder %s57, %s59
      %p63 = scmp.eq.s32.totalorder %s28, 0
      %p64 = por %p62, %p63
      %p65 = scmp.ne.s32.totalorder %s57, %s59
      %p66 = scmp.eq.s32.totalorder %s33, 1
      %p67 = por %p65, %p66
      %p68 = scmp.ne.s32.totalorder %s59, %s60
      %p69 = scmp.eq.s32.totalorder %s33, 0
      %p70 = por %p68, %p69
      %p71 = scmp.ne.s32.totalorder %s59, %s60
      %p72 = scmp.eq.s32.totalorder %s34, 1
      %p73 = por %p71, %p72
      %p75 = scmp.ne.s32.totalorder %s60, %s74
      %p76 = scmp.eq.s32.totalorder %s34, 0
      %p77 = por %p75, %p76
      %s79 = sadd.s32 %s78, 1
      %p82 = scmp.eq.s32.totalorder %s28, 1
      %p83 = scmp.ne.s32.totalorder %s78, %s80
      %p84 = scmp.eq.s32.totalorder %s28, 0
      %p85 = por %p83, %p84
      %p86 = scmp.ne.s32.totalorder %s78, %s80
      %p87 = scmp.eq.s32.totalorder %s33, 1
      %p88 = por %p86, %p87
      %p89 = scmp.ne.s32.totalorder %s80, %s81
      %p90 = scmp.eq.s32.totalorder %s33, 0
      %p91 = por %p89, %p90
      %p92 = scmp.ne.s32.totalorder %s80, %s81
      %p93 = scmp.eq.s32.totalorder %s34, 1
      %p94 = por %p92, %p93
      %p96 = scmp.ne.s32.totalorder %s81, %s95
      %p97 = scmp.eq.s32.totalorder %s34, 0
      %p98 = por %p96, %p97
      %s100 = sadd.s32 %s99, 1
      %p103 = scmp.eq.s32.totalorder %s28, 1
      %p104 = scmp.ne.s32.totalorder %s99, %s101
      %p105 = scmp.eq.s32.totalorder %s28, 0
      %p106 = por %p104, %p105
      %p107 = scmp.ne.s32.totalorder %s99, %s101
      %p108 = scmp.eq.s32.totalorder %s33, 1
      %p109 = por %p107, %p108
      %p110 = scmp.ne.s32.totalorder %s101, %s102
      %p111 = scmp.eq.s32.totalorder %s33, 0
      %p112 = por %p110, %p111
      %p113 = scmp.ne.s32.totalorder %s101, %s102
      %p114 = scmp.eq.s32.totalorder %s34, 1
      %p115 = por %p113, %p114
      %p117 = scmp.ne.s32.totalorder %s102, %s116
      %p118 = scmp.eq.s32.totalorder %s34, 0
      %p119 = por %p117, %p118
      %s121 = sadd.s32 %s120, 1
      %p124 = scmp.eq.s32.totalorder %s28, 1
      %p125 = scmp.ne.s32.totalorder %s120, %s122
      %p126 = scmp.eq.s32.totalorder %s28, 0
      %p127 = por %p125, %p126
      %p128 = scmp.ne.s32.totalorder %s120, %s122
      %p129 = scmp.eq.s32.totalorder %s33, 1
      %p130 = por %p128, %p129
      %p131 = scmp.ne.s32.totalorder %s122, %s123
      %p132 = scmp.eq.s32.totalorder %s33, 0
      %p133 = por %p131, %p132
      %p134 = scmp.ne.s32.totalorder %s122, %s123
      %p135 = scmp.eq.s32.totalorder %s34, 1
      %p136 = por %p134, %p135
      %p138 = scmp.ne.s32.totalorder %s123, %s137
      %p139 = scmp.eq.s32.totalorder %s34, 0
      %p140 = por %p138, %p139
      %s142 = sadd.s32 %s141, 1
      %p145 = scmp.eq.s32.totalorder %s28, 1
      %p146 = scmp.ne.s32.totalorder %s141, %s143
      %p147 = scmp.eq.s32.totalorder %s28, 0
      %p148 = por %p146, %p147
      %p149 = scmp.ne.s32.totalorder %s141, %s143
      %p150 = scmp.eq.s32.totalorder %s33, 1
      %p151 = por %p149, %p150
      %p152 = scmp.ne.s32.totalorder %s143, %s144
      %p153 = scmp.eq.s32.totalorder %s33, 0
      %p154 = por %p152, %p153
      %p155 = scmp.ne.s32.totalorder %s143, %s144
      %p156 = scmp.eq.s32.totalorder %s34, 1
      %p157 = por %p155, %p156
      %p159 = scmp.ne.s32.totalorder %s144, %s158
      %p160 = scmp.eq.s32.totalorder %s34, 0
      %p161 = por %p159, %p160
      %s163 = sadd.s32 %s162, 1
      %p166 = scmp.eq.s32.totalorder %s28, 1
      %p167 = scmp.ne.s32.totalorder %s162, %s164
      %p168 = scmp.eq.s32.totalorder %s28, 0
      %p169 = por %p167, %p168
      %p170 = scmp.ne.s32.totalorder %s162, %s164
      %p171 = scmp.eq.s32.totalorder %s33, 1
      %p172 = por %p170, %p171
      %p173 = scmp.ne.s32.totalorder %s164, %s165
      %p174 = scmp.eq.s32.totalorder %s33, 0
      %p175 = por %p173, %p174
      %p176 = scmp.ne.s32.totalorder %s164, %s165
      %p177 = scmp.eq.s32.totalorder %s34, 1
      %p178 = por %p176, %p177
      %p180 = scmp.ne.s32.totalorder %s165, %s179
      %p181 = scmp.eq.s32.totalorder %s34, 0
      %p182 = por %p180, %p181
      %s184 = sadd.s32 %s183, 1
      %p187 = scmp.eq.s32.totalorder %s28, 1
      %p188 = scmp.ne.s32.totalorder %s183, %s185
      %p189 = scmp.eq.s32.totalorder %s28, 0
      %p190 = por %p188, %p189
      %p191 = scmp.ne.s32.totalorder %s183, %s185
      %p192 = scmp.eq.s32.totalorder %s33, 1
      %p193 = por %p191, %p192
      %p194 = scmp.ne.s32.totalorder %s185, %s186
      %p195 = scmp.eq.s32.totalorder %s33, 0
      %p196 = por %p194, %p195
      %p197 = scmp.ne.s32.totalorder %s185, %s186
      %p198 = scmp.eq.s32.totalorder %s34, 1
      %p199 = por %p197, %p198
      %p201 = scmp.ne.s32.totalorder %s186, %s200
      %p202 = scmp.eq.s32.totalorder %s34, 0
      %p203 = por %p201, %p202
      %s205 = sadd.s32 %s204, 1
      %p208 = scmp.eq.s32.totalorder %s28, 1
      %p209 = scmp.ne.s32.totalorder %s204, %s206
      %p210 = scmp.eq.s32.totalorder %s28, 0
      %p211 = por %p209, %p210
      %p212 = scmp.ne.s32.totalorder %s204, %s206
      %p213 = scmp.eq.s32.totalorder %s33, 1
      %p214 = por %p212, %p213
      %p215 = scmp.ne.s32.totalorder %s206, %s207
      %p216 = scmp.eq.s32.totalorder %s33, 0
      %p217 = por %p215, %p216
      %p218 = scmp.ne.s32.totalorder %s206, %s207
      %p219 = scmp.eq.s32.totalorder %s34, 1
      %p220 = por %p218, %p219
      %p222 = scmp.ne.s32.totalorder %s207, %s221
      %p223 = scmp.eq.s32.totalorder %s34, 0
      %p224 = por %p222, %p223
      %s226 = sadd.s32 %s225, 1
      %p229 = scmp.eq.s32.totalorder %s28, 1
      %p230 = scmp.ne.s32.totalorder %s225, %s227
      %p231 = scmp.eq.s32.totalorder %s28, 0
      %p232 = por %p230, %p231
      %p233 = scmp.ne.s32.totalorder %s225, %s227
      %p234 = scmp.eq.s32.totalorder %s33, 1
      %p235 = por %p233, %p234
      %p236 = scmp.ne.s32.totalorder %s227, %s228
      %p237 = scmp.eq.s32.totalorder %s33, 0
      %p238 = por %p236, %p237
      %p239 = scmp.ne.s32.totalorder %s227, %s228
      %p240 = scmp.eq.s32.totalorder %s34, 1
      %p241 = por %p239, %p240
      %p243 = scmp.ne.s32.totalorder %s228, %s242
      %p244 = scmp.eq.s32.totalorder %s34, 0
      %p245 = por %p243, %p244
      %s247 = sadd.s32 %s246, 1
      %p250 = scmp.eq.s32.totalorder %s28, 1
      %p251 = scmp.ne.s32.totalorder %s246, %s248
      %p252 = scmp.eq.s32.totalorder %s28, 0
      %p253 = por %p251, %p252
      %p254 = scmp.ne.s32.totalorder %s246, %s248
      %p255 = scmp.eq.s32.totalorder %s33, 1
      %p256 = por %p254, %p255
      %p257 = scmp.ne.s32.totalorder %s248, %s249
      %p258 = scmp.eq.s32.totalorder %s33, 0
      %p259 = por %p257, %p258
      %p260 = scmp.ne.s32.totalorder %s248, %s249
      %p261 = scmp.eq.s32.totalorder %s34, 1
      %p262 = por %p260, %p261
      %p264 = scmp.ne.s32.totalorder %s249, %s263
      %p265 = scmp.eq.s32.totalorder %s34, 0
      %p266 = por %p264, %p265
      %s267 = ssub.s32 %s28, %s35
      %p268 = scmp.eq.s32.totalorder %s267, 0
      %s270 = sadd.s32 %s269, 1
      %s271 = scalar_select %p268, %s269, %s270
      %p274 = pneg %p268
      %p275 = scmp.eq.s32.totalorder %s28, 1
      %p276 = por %p274, %p275
      %p277 = scmp.ne.s32.totalorder %s269, %s272
      %p278 = scmp.eq.s32.totalorder %s28, 0
      %p279 = por %p277, %p278
      %p280 = scmp.ne.s32.totalorder %s269, %s272
      %p281 = scmp.eq.s32.totalorder %s33, 1
      %p282 = por %p280, %p281
      %p283 = scmp.ne.s32.totalorder %s272, %s273
      %p284 = scmp.eq.s32.totalorder %s33, 0
      %p285 = por %p283, %p284
      %p286 = scmp.ne.s32.totalorder %s272, %s273
      %p287 = scmp.eq.s32.totalorder %s34, 1
      %p288 = por %p286, %p287
      %p290 = scmp.ne.s32.totalorder %s273, %s289
      %p291 = scmp.eq.s32.totalorder %s34, 0
      %p292 = por %p290, %p291
      %s294 = sadd.s32 %s293, 1
      %p297 = scmp.eq.s32.totalorder %s28, 1
      %p298 = scmp.ne.s32.totalorder %s293, %s295
      %p299 = scmp.eq.s32.totalorder %s28, 0
      %p300 = por %p298, %p299
      %p301 = scmp.ne.s32.totalorder %s293, %s295
      %p302 = scmp.eq.s32.totalorder %s33, 1
      %p303 = por %p301, %p302
      %p304 = scmp.ne.s32.totalorder %s295, %s296
      %p305 = scmp.eq.s32.totalorder %s33, 0
      %p306 = por %p304, %p305
      %p307 = scmp.ne.s32.totalorder %s295, %s296
      %p308 = scmp.eq.s32.totalorder %s34, 1
      %p309 = por %p307, %p308
      %p311 = scmp.ne.s32.totalorder %s296, %s310
      %p312 = scmp.eq.s32.totalorder %s34, 0
      %p313 = por %p311, %p312
      %s315 = sadd.s32 %s314, 1
      %p318 = scmp.eq.s32.totalorder %s28, 1
      %p319 = scmp.ne.s32.totalorder %s314, %s316
      %p320 = scmp.eq.s32.totalorder %s28, 0
      %p321 = por %p319, %p320
      %p322 = scmp.ne.s32.totalorder %s314, %s316
      %p323 = scmp.eq.s32.totalorder %s33, 1
      %p324 = por %p322, %p323
      %p325 = scmp.ne.s32.totalorder %s316, %s317
      %p326 = scmp.eq.s32.totalorder %s33, 0
      %p327 = por %p325, %p326
      %p328 = scmp.ne.s32.totalorder %s316, %s317
      %p329 = scmp.eq.s32.totalorder %s34, 1
      %p330 = por %p328, %p329
      %p332 = scmp.ne.s32.totalorder %s317, %s331
      %p333 = scmp.eq.s32.totalorder %s34, 0
      %p334 = por %p332, %p333
      %s336 = sadd.s32 %s335, 1
      %p339 = scmp.eq.s32.totalorder %s28, 1
      %p340 = scmp.ne.s32.totalorder %s335, %s337
      %p341 = scmp.eq.s32.totalorder %s28, 0
      %p342 = por %p340, %p341
      %p343 = scmp.ne.s32.totalorder %s335, %s337
      %p344 = scmp.eq.s32.totalorder %s33, 1
      %p345 = por %p343, %p344
      %p346 = scmp.ne.s32.totalorder %s337, %s338
      %p347 = scmp.eq.s32.totalorder %s33, 0
      %p348 = por %p346, %p347
      %p349 = scmp.ne.s32.totalorder %s337, %s338
      %p350 = scmp.eq.s32.totalorder %s34, 1
      %p351 = por %p349, %p350
      %p353 = scmp.ne.s32.totalorder %s338, %s352
      %p354 = scmp.eq.s32.totalorder %s34, 0
      %p355 = por %p353, %p354
      %s357 = sadd.s32 %s356, 1
      %p360 = scmp.eq.s32.totalorder %s28, 1
      %p361 = scmp.ne.s32.totalorder %s356, %s358
      %p362 = scmp.eq.s32.totalorder %s28, 0
      %p363 = por %p361, %p362
      %p364 = scmp.ne.s32.totalorder %s356, %s358
      %p365 = scmp.eq.s32.totalorder %s33, 1
      %p366 = por %p364, %p365
      %p367 = scmp.ne.s32.totalorder %s358, %s359
      %p368 = scmp.eq.s32.totalorder %s33, 0
      %p369 = por %p367, %p368
      %p370 = scmp.ne.s32.totalorder %s358, %s359
      %p371 = scmp.eq.s32.totalorder %s34, 1
      %p372 = por %p370, %p371
      %p374 = scmp.ne.s32.totalorder %s359, %s373
      %p375 = scmp.eq.s32.totalorder %s34, 0
      %p376 = por %p374, %p375
      %s378 = sadd.s32 %s377, 1
      %p381 = scmp.eq.s32.totalorder %s28, 1
      %p382 = scmp.ne.s32.totalorder %s377, %s379
      %p383 = scmp.eq.s32.totalorder %s28, 0
      %p384 = por %p382, %p383
      %p385 = scmp.ne.s32.totalorder %s377, %s379
      %p386 = scmp.eq.s32.totalorder %s33, 1
      %p387 = por %p385, %p386
      %p388 = scmp.ne.s32.totalorder %s379, %s380
      %p389 = scmp.eq.s32.totalorder %s33, 0
      %p390 = por %p388, %p389
      %p391 = scmp.ne.s32.totalorder %s379, %s380
      %p392 = scmp.eq.s32.totalorder %s34, 1
      %p393 = por %p391, %p392
      %p395 = scmp.ne.s32.totalorder %s380, %s394
      %p396 = scmp.eq.s32.totalorder %s34, 0
      %p397 = por %p395, %p396
      %s399 = sadd.s32 %s398, 1
      %p402 = scmp.eq.s32.totalorder %s28, 1
      %p403 = scmp.ne.s32.totalorder %s398, %s400
      %p404 = scmp.eq.s32.totalorder %s28, 0
      %p405 = por %p403, %p404
      %p406 = scmp.ne.s32.totalorder %s398, %s400
      %p407 = scmp.eq.s32.totalorder %s33, 1
      %p408 = por %p406, %p407
      %p409 = scmp.ne.s32.totalorder %s400, %s401
      %p410 = scmp.eq.s32.totalorder %s33, 0
      %p411 = por %p409, %p410
      %p412 = scmp.ne.s32.totalorder %s400, %s401
      %p413 = scmp.eq.s32.totalorder %s34, 1
      %p414 = por %p412, %p413
      %p416 = scmp.ne.s32.totalorder %s401, %s415
      %p417 = scmp.eq.s32.totalorder %s34, 0
      %p418 = por %p416, %p417
      %p419 = scmp.le.s32.totalorder 1, %s28
      %p420 = scmp.lt.s32.totalorder %s28, 3
      %p421 = pnand %p419, %p420
      %p422 = pneg %p421
      // Predicated region
      $region9: #{unified_model_forward.1} parent=5 // pred_check
        _
      $region10: #{unified_model_forward.1} parent=5 // pred_check_branch
        %424 = sbr.rel (%p421) target = $region12
      $region11: #{unified_model_forward.1} parent=5 // pred_region
        %s425 = ssub.s32 %s28, 1
        // Predicated region
        $region13: #{unified_model_forward.1} parent=11 // pred_check
          %p426 = pneg %p49
        $region14: #{unified_model_forward.1} parent=11 // pred_check_branch
          %428 = sbr.rel (%p426) target = $region16
        $region15: #{unified_model_forward.1} parent=11 // pred_region
          %s430 = ssub.s32 256, 256
          %431 = vsyncadd [#allocation4], %s430
          %s432 = sshll.u32 [#allocation3], 4
          %s433 = int_to_ptr.vmem [resolvable:$true] %s432
          %438 = dma.hbm_to_vmem [thread:$0]  %s0, 256, %s433, [#allocation4], 128, 128, 8
        $region16: #{unified_model_forward.1} parent=11 // pred_fallthru
          _
        // Predicated region
        $region17: #{unified_model_forward.1} parent=11 // pred_check
          %p439 = pneg %p70
        $region18: #{unified_model_forward.1} parent=11 // pred_check_branch
          %441 = sbr.rel (%p439) target = $region20
        $region19: #{unified_model_forward.1} parent=11 // pred_region
          %s443 = ssub.s32 256, 256
          %444 = vsyncadd [#allocation7], %s443
          %s445 = sshll.u32 [#allocation6], 4
          %s446 = int_to_ptr.vmem [resolvable:$true] %s445
          %451 = dma.hbm_to_vmem [thread:$0]  %s1, 256, %s446, [#allocation7], 128, 128, 8
        $region20: #{unified_model_forward.1} parent=11 // pred_fallthru
          _
        // Predicated region
        $region21: #{unified_model_forward.1} parent=11 // pred_check
          %p452 = pneg %p91
        $region22: #{unified_model_forward.1} parent=11 // pred_check_branch
          %454 = sbr.rel (%p452) target = $region24
        $region23: #{unified_model_forward.1} parent=11 // pred_region
          _
        $region24: #{unified_model_forward.1} parent=11 // pred_fallthru
          _
        // Predicated region
        $region25: #{unified_model_forward.1} parent=11 // pred_check
          %p455 = pneg %p112
        $region26: #{unified_model_forward.1} parent=11 // pred_check_branch
          %457 = sbr.rel (%p455) target = $region28
        $region27: #{unified_model_forward.1} parent=11 // pred_region
          %s459 = ssub.s32 512, 512
          %460 = vsyncadd [#allocation7], %s459
          %s461 = sshll.u32 [#allocation8], 4
          %s462 = int_to_ptr.vmem [resolvable:$true] %s461
          %467 = dma.hbm_to_vmem [thread:$0]  %s3, 512, %s462, [#allocation7], 128, 128, 8
        $region28: #{unified_model_forward.1} parent=11 // pred_fallthru
          _
        // Predicated region
        $region29: #{unified_model_forward.1} parent=11 // pred_check
          %p468 = pneg %p133
        $region30: #{unified_model_forward.1} parent=11 // pred_check_branch
          %470 = sbr.rel (%p468) target = $region32
        $region31: #{unified_model_forward.1} parent=11 // pred_region
          _
        $region32: #{unified_model_forward.1} parent=11 // pred_fallthru
          _
        // Predicated region
        $region33: #{unified_model_forward.1} parent=11 // pred_check
          %p471 = pneg %p154
        $region34: #{unified_model_forward.1} parent=11 // pred_check_branch
          %473 = sbr.rel (%p471) target = $region36
        $region35: #{unified_model_forward.1} parent=11 // pred_region
          _
        $region36: #{unified_model_forward.1} parent=11 // pred_fallthru
          _
        // Predicated region
        $region37: #{unified_model_forward.1} parent=11 // pred_check
          %p474 = pneg %p175
        $region38: #{unified_model_forward.1} parent=11 // pred_check_branch
          %476 = sbr.rel (%p474) target = $region40
        $region39: #{unified_model_forward.1} parent=11 // pred_region
          _
        $region40: #{unified_model_forward.1} parent=11 // pred_fallthru
          _
        // Predicated region
        $region41: #{unified_model_forward.1} parent=11 // pred_check
          %p477 = pneg %p196
        $region42: #{unified_model_forward.1} parent=11 // pred_check_branch
          %479 = sbr.rel (%p477) target = $region44
        $region43: #{unified_model_forward.1} parent=11 // pred_region
          _
        $region44: #{unified_model_forward.1} parent=11 // pred_fallthru
          _
        // Predicated region
        $region45: #{unified_model_forward.1} parent=11 // pred_check
          %p480 = pneg %p217
        $region46: #{unified_model_forward.1} parent=11 // pred_check_branch
          %482 = sbr.rel (%p480) target = $region48
        $region47: #{unified_model_forward.1} parent=11 // pred_region
          _
        $region48: #{unified_model_forward.1} parent=11 // pred_fallthru
          _
        // Predicated region
        $region49: #{unified_model_forward.1} parent=11 // pred_check
          %p483 = pneg %p238
        $region50: #{unified_model_forward.1} parent=11 // pred_check_branch
          %485 = sbr.rel (%p483) target = $region52
        $region51: #{unified_model_forward.1} parent=11 // pred_region
          _
        $region52: #{unified_model_forward.1} parent=11 // pred_fallthru
          _
        // Predicated region
        $region53: #{unified_model_forward.1} parent=11 // pred_check
          %p486 = pneg %p259
        $region54: #{unified_model_forward.1} parent=11 // pred_check_branch
          %488 = sbr.rel (%p486) target = $region56
        $region55: #{unified_model_forward.1} parent=11 // pred_region
          _
        $region56: #{unified_model_forward.1} parent=11 // pred_fallthru
          _
        // Predicated region
        $region57: #{unified_model_forward.1} parent=11 // pred_check
          %p489 = pneg %p306
        $region58: #{unified_model_forward.1} parent=11 // pred_check_branch
          %491 = sbr.rel (%p489) target = $region60
        $region59: #{unified_model_forward.1} parent=11 // pred_region
          _
        $region60: #{unified_model_forward.1} parent=11 // pred_fallthru
          _
        // Predicated region
        $region61: #{unified_model_forward.1} parent=11 // pred_check
          %p492 = pneg %p327
        $region62: #{unified_model_forward.1} parent=11 // pred_check_branch
          %494 = sbr.rel (%p492) target = $region64
        $region63: #{unified_model_forward.1} parent=11 // pred_region
          _
        $region64: #{unified_model_forward.1} parent=11 // pred_fallthru
          _
        // Predicated region
        $region65: #{unified_model_forward.1} parent=11 // pred_check
          %p495 = pneg %p348
        $region66: #{unified_model_forward.1} parent=11 // pred_check_branch
          %497 = sbr.rel (%p495) target = $region68
        $region67: #{unified_model_forward.1} parent=11 // pred_region
          _
        $region68: #{unified_model_forward.1} parent=11 // pred_fallthru
          _
        // Predicated region
        $region69: #{unified_model_forward.1} parent=11 // pred_check
          %p498 = pneg %p369
        $region70: #{unified_model_forward.1} parent=11 // pred_check_branch
          %500 = sbr.rel (%p498) target = $region72
        $region71: #{unified_model_forward.1} parent=11 // pred_region
          _
        $region72: #{unified_model_forward.1} parent=11 // pred_fallthru
          _
      $region12: #{unified_model_forward.1} parent=5 // pred_fallthru
        _
      %p501 = scmp.lt.s32.totalorder %s28, 2
      // Predicated region
      $region73: #{unified_model_forward.1} parent=5 // pred_check
        %p502 = pneg %p501
      $region74: #{unified_model_forward.1} parent=5 // pred_check_branch
        %504 = sbr.rel (%p502) target = $region76
      $region75: #{unified_model_forward.1} parent=5 // pred_region
        // Predicated region
        $region77: #{unified_model_forward.1} parent=75 // pred_check
          %p505 = pneg %p279
        $region78: #{unified_model_forward.1} parent=75 // pred_check_branch
          %507 = sbr.rel (%p505) target = $region80
        $region79: #{unified_model_forward.1} parent=75 // pred_region
          %p508 = scmp.lt.s32.totalorder %s28, 1
          %s509 = scalar_select %p508, %s28, 1
          %s510 = smul.addr %s509, 8
          %s511 = smul.addr %s510, 8
          %s512 = scalar_lea.vmem %s11, %s511
        $region80: #{unified_model_forward.1} parent=75 // pred_fallthru
          _
      $region76: #{unified_model_forward.1} parent=5 // pred_fallthru
        _
      %p513 = scmp.le.s32.totalorder 1, %s28
      %p514 = scmp.lt.s32.totalorder %s28, 3
      %p515 = pnand %p513, %p514
      %p516 = pneg %p515
      // Predicated region
      $region81: #{unified_model_forward.1} parent=5 // pred_check
        _
      $region82: #{unified_model_forward.1} parent=5 // pred_check_branch
        %518 = sbr.rel (%p515) target = $region84
      $region83: #{unified_model_forward.1} parent=5 // pred_region
        %s519 = ssub.s32 %s28, 1
        // Predicated region
        $region85: #{unified_model_forward.1} parent=83 // pred_check
          %p520 = pneg %p49
        $region86: #{unified_model_forward.1} parent=83 // pred_check_branch
          %522 = sbr.rel (%p520) target = $region88
        $region87: #{unified_model_forward.1} parent=83 // pred_region
          %523 = dma.done [#allocation4], 256
        $region88: #{unified_model_forward.1} parent=83 // pred_fallthru
          _
        // Predicated region
        $region89: #{unified_model_forward.1} parent=83 // pred_check
          %p524 = pneg %p70
        $region90: #{unified_model_forward.1} parent=83 // pred_check_branch
          %526 = sbr.rel (%p524) target = $region92
        $region91: #{unified_model_forward.1} parent=83 // pred_region
          %527 = dma.done [#allocation7], 256
        $region92: #{unified_model_forward.1} parent=83 // pred_fallthru
          _
        // Predicated region
        $region93: #{unified_model_forward.1} parent=83 // pred_check
          %p528 = pneg %p112
        $region94: #{unified_model_forward.1} parent=83 // pred_check_branch
          %530 = sbr.rel (%p528) target = $region96
        $region95: #{unified_model_forward.1} parent=83 // pred_region
          %531 = dma.done [#allocation7], 512
        $region96: #{unified_model_forward.1} parent=83 // pred_fallthru
          _
        %p532 = pneg %p49
        %p533 = pneg %p46
        %p534 = pneg %p70
        %p535 = pneg %p67
        %p536 = pneg %p91
        %p537 = pneg %p88
        %p538 = pneg %p112
        %p539 = pneg %p109
        %p540 = pneg %p133
        %p541 = pneg %p130
        %p542 = pneg %p154
        %p543 = pneg %p151
        %p544 = pneg %p175
        %p545 = pneg %p172
        %p546 = pneg %p196
        %p547 = pneg %p193
        %p548 = pneg %p217
        %p549 = pneg %p214
        %p550 = pneg %p238
        %p551 = pneg %p235
        %p552 = pneg %p259
        %p553 = pneg %p256
        %p554 = scmp.lt.s32.totalorder %s33, 1
        %s555 = scalar_select %p554, %s33, 1
        %s556 = smul.addr %s555, 8
        %s557 = smul.addr %s556, 8
        %s558 = scalar_lea.vmem %s11, %s557
        %p559 = pneg %p285
        %p560 = pneg %p282
        %p561 = pneg %p306
        %p562 = pneg %p303
        %p563 = pneg %p327
        %p564 = pneg %p324
        %p565 = pneg %p348
        %p566 = pneg %p345
        %p567 = pneg %p369
        %p568 = pneg %p366
        %p569 = pneg %p390
        %p570 = pneg %p387
        %p571 = pneg %p411
        %p572 = pneg %p408
        %p573 = scmp.lt.s32.totalorder %s33, 1
        %s574 = scalar_select %p573, %s33, 1
        %s575 = smul.addr %s574, 8
        %s576 = smul.addr %s575, 8
        %s577 = scalar_lea.vmem %s11, %s576
        %p579 = scmp.eq.s32.totalorder %s33, 0
        // Predicated region
        $region97: #{unified_model_forward.1} parent=83 // pred_check
          %p580 = pneg %p579
        $region98: #{unified_model_forward.1} parent=83 // pred_check_branch
          %582 = sbr.rel (%p580) target = $region100
        $region99: #{unified_model_forward.1} parent=83 // pred_region
          %583 = vst [vmem:[#allocation2] sm:$0x3] 0.0
        $region100: #{unified_model_forward.1} parent=83 // pred_fallthru
          _
        %v584 = vld [vmem:[%s577] sm:$0xff]
        %v585 = vld [vmem:[%s577 + $0x8] sm:$0xff]
        %v586 = vld [vmem:[%s577 + $0x10] sm:$0xff]
        %v587 = vld [vmem:[%s577 + $0x18] sm:$0xff]
        %v588 = vld [vmem:[%s577 + $0x20] sm:$0xff]
        %v589 = vld [vmem:[%s577 + $0x28] sm:$0xff]
        %v590 = vld [vmem:[%s577 + $0x30] sm:$0xff]
        %v591 = vld [vmem:[%s577 + $0x38] sm:$0xff]
        %v592 = vpack.c.bf16 %v584, %v584
        %v593 = vpack.c.bf16 %v585, %v585
        %v594 = vpack.c.bf16 %v586, %v586
        %v595 = vpack.c.bf16 %v587, %v587
        %v596 = vpack.c.bf16 %v588, %v588
        %v597 = vpack.c.bf16 %v589, %v589
        %v598 = vpack.c.bf16 %v590, %v590
        %v599 = vpack.c.bf16 %v591, %v591
        %v600 = vld [vmem:[%s12] sm:$0xf]
        %v601 = vld [vmem:[%s12 + $0x4] sm:$0xf]
        %v602 = vld [vmem:[%s12 + $0x8] sm:$0xf]
        %v603 = vld [vmem:[%s12 + $0xc] sm:$0xf]
        %v604 = vld [vmem:[%s12 + $0x10] sm:$0xf]
        %v605 = vld [vmem:[%s12 + $0x14] sm:$0xf]
        %v606 = vld [vmem:[%s12 + $0x18] sm:$0xf]
        %v607 = vld [vmem:[%s12 + $0x1c] sm:$0xf]
        %v608 = vld [vmem:[%s12 + $0x20] sm:$0xf]
        %v609 = vld [vmem:[%s12 + $0x24] sm:$0xf]
        %v610 = vld [vmem:[%s12 + $0x28] sm:$0xf]
        %v611 = vld [vmem:[%s12 + $0x2c] sm:$0xf]
        %v612 = vld [vmem:[%s12 + $0x30] sm:$0xf]
        %v613 = vld [vmem:[%s12 + $0x34] sm:$0xf]
        %v614 = vld [vmem:[%s12 + $0x38] sm:$0xf]
        %v615 = vld [vmem:[%s12 + $0x3c] sm:$0xf]
        %v616 = vld [vmem:[%s12 + $0x40] sm:$0xf]
        %v617 = vld [vmem:[%s12 + $0x44] sm:$0xf]
        %v618 = vld [vmem:[%s12 + $0x48] sm:$0xf]
        %v619 = vld [vmem:[%s12 + $0x4c] sm:$0xf]
        %v620 = vld [vmem:[%s12 + $0x50] sm:$0xf]
        %v621 = vld [vmem:[%s12 + $0x54] sm:$0xf]
        %v622 = vld [vmem:[%s12 + $0x58] sm:$0xf]
        %v623 = vld [vmem:[%s12 + $0x5c] sm:$0xf]
        %v624 = vld [vmem:[%s12 + $0x60] sm:$0xf]
        %v625 = vld [vmem:[%s12 + $0x64] sm:$0xf]
        %v626 = vld [vmem:[%s12 + $0x68] sm:$0xf]
        %v627 = vld [vmem:[%s12 + $0x6c] sm:$0xf]
        %v628 = vld [vmem:[%s12 + $0x70] sm:$0xf]
        %v629 = vld [vmem:[%s12 + $0x74] sm:$0xf]
        %v630 = vld [vmem:[%s12 + $0x78] sm:$0xf]
        %v631 = vld [vmem:[%s12 + $0x7c] sm:$0xf]
        %v632 = vld [vmem:[%s12 + $0x80] sm:$0xf]
        %v633 = vld [vmem:[%s12 + $0x84] sm:$0xf]
        %v634 = vld [vmem:[%s12 + $0x88] sm:$0xf]
        %v635 = vld [vmem:[%s12 + $0x8c] sm:$0xf]
        %v636 = vld [vmem:[%s12 + $0x90] sm:$0xf]
        %v637 = vld [vmem:[%s12 + $0x94] sm:$0xf]
        %v638 = vld [vmem:[%s12 + $0x98] sm:$0xf]
        %v639 = vld [vmem:[%s12 + $0x9c] sm:$0xf]
        %v640 = vld [vmem:[%s12 + $0xa0] sm:$0xf]
        %v641 = vld [vmem:[%s12 + $0xa4] sm:$0xf]
        %v642 = vld [vmem:[%s12 + $0xa8] sm:$0xf]
        %v643 = vld [vmem:[%s12 + $0xac] sm:$0xf]
        %v644 = vld [vmem:[%s12 + $0xb0] sm:$0xf]
        %v645 = vld [vmem:[%s12 + $0xb4] sm:$0xf]
        %v646 = vld [vmem:[%s12 + $0xb8] sm:$0xf]
        %v647 = vld [vmem:[%s12 + $0xbc] sm:$0xf]
        %v648 = vld [vmem:[%s12 + $0xc0] sm:$0xf]
        %v649 = vld [vmem:[%s12 + $0xc4] sm:$0xf]
        %v650 = vld [vmem:[%s12 + $0xc8] sm:$0xf]
        %v651 = vld [vmem:[%s12 + $0xcc] sm:$0xf]
        %v652 = vld [vmem:[%s12 + $0xd0] sm:$0xf]
        %v653 = vld [vmem:[%s12 + $0xd4] sm:$0xf]
        %v654 = vld [vmem:[%s12 + $0xd8] sm:$0xf]
        %v655 = vld [vmem:[%s12 + $0xdc] sm:$0xf]
        %v656 = vld [vmem:[%s12 + $0xe0] sm:$0xf]
        %v657 = vld [vmem:[%s12 + $0xe4] sm:$0xf]
        %v658 = vld [vmem:[%s12 + $0xe8] sm:$0xf]
        %v659 = vld [vmem:[%s12 + $0xec] sm:$0xf]
        %v660 = vld [vmem:[%s12 + $0xf0] sm:$0xf]
        %v661 = vld [vmem:[%s12 + $0xf4] sm:$0xf]
        %v662 = vld [vmem:[%s12 + $0xf8] sm:$0xf]
        %v663 = vld [vmem:[%s12 + $0xfc] sm:$0xf]
        %v664 = vld [vmem:[%s12 + $0x100] sm:$0xf]
        %v665 = vld [vmem:[%s12 + $0x104] sm:$0xf]
        %v666 = vld [vmem:[%s12 + $0x108] sm:$0xf]
        %v667 = vld [vmem:[%s12 + $0x10c] sm:$0xf]
        %v668 = vld [vmem:[%s12 + $0x110] sm:$0xf]
        %v669 = vld [vmem:[%s12 + $0x114] sm:$0xf]
        %v670 = vld [vmem:[%s12 + $0x118] sm:$0xf]
        %v671 = vld [vmem:[%s12 + $0x11c] sm:$0xf]
        %v672 = vld [vmem:[%s12 + $0x120] sm:$0xf]
        %v673 = vld [vmem:[%s12 + $0x124] sm:$0xf]
        %v674 = vld [vmem:[%s12 + $0x128] sm:$0xf]
        %v675 = vld [vmem:[%s12 + $0x12c] sm:$0xf]
        %v676 = vld [vmem:[%s12 + $0x130] sm:$0xf]
        %v677 = vld [vmem:[%s12 + $0x134] sm:$0xf]
        %v678 = vld [vmem:[%s12 + $0x138] sm:$0xf]
        %v679 = vld [vmem:[%s12 + $0x13c] sm:$0xf]
        %v680 = vld [vmem:[%s12 + $0x140] sm:$0xf]
        %v681 = vld [vmem:[%s12 + $0x144] sm:$0xf]
        %v682 = vld [vmem:[%s12 + $0x148] sm:$0xf]
        %v683 = vld [vmem:[%s12 + $0x14c] sm:$0xf]
        %v684 = vld [vmem:[%s12 + $0x150] sm:$0xf]
        %v685 = vld [vmem:[%s12 + $0x154] sm:$0xf]
        %v686 = vld [vmem:[%s12 + $0x158] sm:$0xf]
        %v687 = vld [vmem:[%s12 + $0x15c] sm:$0xf]
        %v688 = vld [vmem:[%s12 + $0x160] sm:$0xf]
        %v689 = vld [vmem:[%s12 + $0x164] sm:$0xf]
        %v690 = vld [vmem:[%s12 + $0x168] sm:$0xf]
        %v691 = vld [vmem:[%s12 + $0x16c] sm:$0xf]
        %v692 = vld [vmem:[%s12 + $0x170] sm:$0xf]
        %v693 = vld [vmem:[%s12 + $0x174] sm:$0xf]
        %v694 = vld [vmem:[%s12 + $0x178] sm:$0xf]
        %v695 = vld [vmem:[%s12 + $0x17c] sm:$0xf]
        %v696 = vld [vmem:[%s12 + $0x180] sm:$0xf]
        %v697 = vld [vmem:[%s12 + $0x184] sm:$0xf]
        %v698 = vld [vmem:[%s12 + $0x188] sm:$0xf]
        %v699 = vld [vmem:[%s12 + $0x18c] sm:$0xf]
        %v700 = vld [vmem:[%s12 + $0x190] sm:$0xf]
        %v701 = vld [vmem:[%s12 + $0x194] sm:$0xf]
        %v702 = vld [vmem:[%s12 + $0x198] sm:$0xf]
        %v703 = vld [vmem:[%s12 + $0x19c] sm:$0xf]
        %v704 = vld [vmem:[%s12 + $0x1a0] sm:$0xf]
        %v705 = vld [vmem:[%s12 + $0x1a4] sm:$0xf]
        %v706 = vld [vmem:[%s12 + $0x1a8] sm:$0xf]
        %v707 = vld [vmem:[%s12 + $0x1ac] sm:$0xf]
        %v708 = vld [vmem:[%s12 + $0x1b0] sm:$0xf]
        %v709 = vld [vmem:[%s12 + $0x1b4] sm:$0xf]
        %v710 = vld [vmem:[%s12 + $0x1b8] sm:$0xf]
        %v711 = vld [vmem:[%s12 + $0x1bc] sm:$0xf]
        %v712 = vld [vmem:[%s12 + $0x1c0] sm:$0xf]
        %v713 = vld [vmem:[%s12 + $0x1c4] sm:$0xf]
        %v714 = vld [vmem:[%s12 + $0x1c8] sm:$0xf]
        %v715 = vld [vmem:[%s12 + $0x1cc] sm:$0xf]
        %v716 = vld [vmem:[%s12 + $0x1d0] sm:$0xf]
        %v717 = vld [vmem:[%s12 + $0x1d4] sm:$0xf]
        %v718 = vld [vmem:[%s12 + $0x1d8] sm:$0xf]
        %v719 = vld [vmem:[%s12 + $0x1dc] sm:$0xf]
        %v720 = vld [vmem:[%s12 + $0x1e0] sm:$0xf]
        %v721 = vld [vmem:[%s12 + $0x1e4] sm:$0xf]
        %v722 = vld [vmem:[%s12 + $0x1e8] sm:$0xf]
        %v723 = vld [vmem:[%s12 + $0x1ec] sm:$0xf]
        %v724 = vld [vmem:[%s12 + $0x1f0] sm:$0xf]
        %v725 = vld [vmem:[%s12 + $0x1f4] sm:$0xf]
        %v726 = vld [vmem:[%s12 + $0x1f8] sm:$0xf]
        %v727 = vld [vmem:[%s12 + $0x1fc] sm:$0xf]
        %v728 = vld [vmem:[%s13] sm:$0x1]
        %v730 = vlaneseq
        %v731 = vshrl.u32 %v730, 7
        %v732 = vsub.s32 0, %v731
        %v733 = vrot.slane %v728, %v732
        %v863 = vunpack.c.l.b16 %v600
        %v864 = vunpack.c.l.b16 %v601
        %v865 = vunpack.c.l.b16 %v602
        %v866 = vunpack.c.l.b16 %v603
        %v867 = vunpack.c.l.b16 %v604
        %v868 = vunpack.c.l.b16 %v605
        %v869 = vunpack.c.l.b16 %v606
        %v870 = vunpack.c.l.b16 %v607
        %v871 = vunpack.c.l.b16 %v608
        %v872 = vunpack.c.l.b16 %v609
        %v873 = vunpack.c.l.b16 %v610
        %v874 = vunpack.c.l.b16 %v611
        %v875 = vunpack.c.l.b16 %v612
        %v876 = vunpack.c.l.b16 %v613
        %v877 = vunpack.c.l.b16 %v614
        %v878 = vunpack.c.l.b16 %v615
        %v879 = vunpack.c.l.b16 %v616
        %v880 = vunpack.c.l.b16 %v617
        %v881 = vunpack.c.l.b16 %v618
        %v882 = vunpack.c.l.b16 %v619
        %v883 = vunpack.c.l.b16 %v620
        %v884 = vunpack.c.l.b16 %v621
        %v885 = vunpack.c.l.b16 %v622
        %v886 = vunpack.c.l.b16 %v623
        %v887 = vunpack.c.l.b16 %v624
        %v888 = vunpack.c.l.b16 %v625
        %v889 = vunpack.c.l.b16 %v626
        %v890 = vunpack.c.l.b16 %v627
        %v891 = vunpack.c.l.b16 %v628
        %v892 = vunpack.c.l.b16 %v629
        %v893 = vunpack.c.l.b16 %v630
        %v894 = vunpack.c.l.b16 %v631
        %v895 = vunpack.c.l.b16 %v632
        %v896 = vunpack.c.l.b16 %v633
        %v897 = vunpack.c.l.b16 %v634
        %v898 = vunpack.c.l.b16 %v635
        %v899 = vunpack.c.l.b16 %v636
        %v900 = vunpack.c.l.b16 %v637
        %v901 = vunpack.c.l.b16 %v638
        %v902 = vunpack.c.l.b16 %v639
        %v903 = vunpack.c.l.b16 %v640
        %v904 = vunpack.c.l.b16 %v641
        %v905 = vunpack.c.l.b16 %v642
        %v906 = vunpack.c.l.b16 %v643
        %v907 = vunpack.c.l.b16 %v644
        %v908 = vunpack.c.l.b16 %v645
        %v909 = vunpack.c.l.b16 %v646
        %v910 = vunpack.c.l.b16 %v647
        %v911 = vunpack.c.l.b16 %v648
        %v912 = vunpack.c.l.b16 %v649
        %v913 = vunpack.c.l.b16 %v650
        %v914 = vunpack.c.l.b16 %v651
        %v915 = vunpack.c.l.b16 %v652
        %v916 = vunpack.c.l.b16 %v653
        %v917 = vunpack.c.l.b16 %v654
        %v918 = vunpack.c.l.b16 %v655
        %v919 = vunpack.c.l.b16 %v656
        %v920 = vunpack.c.l.b16 %v657
        %v921 = vunpack.c.l.b16 %v658
        %v922 = vunpack.c.l.b16 %v659
        %v923 = vunpack.c.l.b16 %v660
        %v924 = vunpack.c.l.b16 %v661
        %v925 = vunpack.c.l.b16 %v662
        %v926 = vunpack.c.l.b16 %v663
        %v927 = vunpack.c.l.b16 %v664
        %v928 = vunpack.c.l.b16 %v665
        %v929 = vunpack.c.l.b16 %v666
        %v930 = vunpack.c.l.b16 %v667
        %v931 = vunpack.c.l.b16 %v668
        %v932 = vunpack.c.l.b16 %v669
        %v933 = vunpack.c.l.b16 %v670
        %v934 = vunpack.c.l.b16 %v671
        %v935 = vunpack.c.l.b16 %v672
        %v936 = vunpack.c.l.b16 %v673
        %v937 = vunpack.c.l.b16 %v674
        %v938 = vunpack.c.l.b16 %v675
        %v939 = vunpack.c.l.b16 %v676
        %v940 = vunpack.c.l.b16 %v677
        %v941 = vunpack.c.l.b16 %v678
        %v942 = vunpack.c.l.b16 %v679
        %v943 = vunpack.c.l.b16 %v680
        %v944 = vunpack.c.l.b16 %v681
        %v945 = vunpack.c.l.b16 %v682
        %v946 = vunpack.c.l.b16 %v683
        %v947 = vunpack.c.l.b16 %v684
        %v948 = vunpack.c.l.b16 %v685
        %v949 = vunpack.c.l.b16 %v686
        %v950 = vunpack.c.l.b16 %v687
        %v951 = vunpack.c.l.b16 %v688
        %v952 = vunpack.c.l.b16 %v689
        %v953 = vunpack.c.l.b16 %v690
        %v954 = vunpack.c.l.b16 %v691
        %v955 = vunpack.c.l.b16 %v692
        %v956 = vunpack.c.l.b16 %v693
        %v957 = vunpack.c.l.b16 %v694
        %v958 = vunpack.c.l.b16 %v695
        %v959 = vunpack.c.l.b16 %v696
        %v960 = vunpack.c.l.b16 %v697
        %v961 = vunpack.c.l.b16 %v698
        %v962 = vunpack.c.l.b16 %v699
        %v963 = vunpack.c.l.b16 %v700
        %v964 = vunpack.c.l.b16 %v701
        %v965 = vunpack.c.l.b16 %v702
        %v966 = vunpack.c.l.b16 %v703
        %v967 = vunpack.c.l.b16 %v704
        %v968 = vunpack.c.l.b16 %v705
        %v969 = vunpack.c.l.b16 %v706
        %v970 = vunpack.c.l.b16 %v707
        %v971 = vunpack.c.l.b16 %v708
        %v972 = vunpack.c.l.b16 %v709
        %v973 = vunpack.c.l.b16 %v710
        %v974 = vunpack.c.l.b16 %v711
        %v975 = vunpack.c.l.b16 %v712
        %v976 = vunpack.c.l.b16 %v713
        %v977 = vunpack.c.l.b16 %v714
        %v978 = vunpack.c.l.b16 %v715
        %v979 = vunpack.c.l.b16 %v716
        %v980 = vunpack.c.l.b16 %v717
        %v981 = vunpack.c.l.b16 %v718
        %v982 = vunpack.c.l.b16 %v719
        %v983 = vunpack.c.l.b16 %v720
        %v984 = vunpack.c.l.b16 %v721
        %v985 = vunpack.c.l.b16 %v722
        %v986 = vunpack.c.l.b16 %v723
        %v987 = vunpack.c.l.b16 %v724
        %v988 = vunpack.c.l.b16 %v725
        %v989 = vunpack.c.l.b16 %v726
        %v990 = vunpack.c.l.b16 %v727
        %v991 = vpack.c.b16 %v864, %v863
        %v992 = vpack.c.b16 %v866, %v865
        %v993 = vpack.c.b16 %v868, %v867
        %v994 = vpack.c.b16 %v870, %v869
        %v995 = vpack.c.b16 %v872, %v871
        %v996 = vpack.c.b16 %v874, %v873
        %v997 = vpack.c.b16 %v876, %v875
        %v998 = vpack.c.b16 %v878, %v877
        %v999 = vpack.c.b16 %v880, %v879
        %v1000 = vpack.c.b16 %v882, %v881
        %v1001 = vpack.c.b16 %v884, %v883
        %v1002 = vpack.c.b16 %v886, %v885
        %v1003 = vpack.c.b16 %v888, %v887
        %v1004 = vpack.c.b16 %v890, %v889
        %v1005 = vpack.c.b16 %v892, %v891
        %v1006 = vpack.c.b16 %v894, %v893
        %v1007 = vpack.c.b16 %v896, %v895
        %v1008 = vpack.c.b16 %v898, %v897
        %v1009 = vpack.c.b16 %v900, %v899
        %v1010 = vpack.c.b16 %v902, %v901
        %v1011 = vpack.c.b16 %v904, %v903
        %v1012 = vpack.c.b16 %v906, %v905
        %v1013 = vpack.c.b16 %v908, %v907
        %v1014 = vpack.c.b16 %v910, %v909
        %v1015 = vpack.c.b16 %v912, %v911
        %v1016 = vpack.c.b16 %v914, %v913
        %v1017 = vpack.c.b16 %v916, %v915
        %v1018 = vpack.c.b16 %v918, %v917
        %v1019 = vpack.c.b16 %v920, %v919
        %v1020 = vpack.c.b16 %v922, %v921
        %v1021 = vpack.c.b16 %v924, %v923
        %v1022 = vpack.c.b16 %v926, %v925
        %v1023 = vpack.c.b16 %v928, %v927
        %v1024 = vpack.c.b16 %v930, %v929
        %v1025 = vpack.c.b16 %v932, %v931
        %v1026 = vpack.c.b16 %v934, %v933
        %v1027 = vpack.c.b16 %v936, %v935
        %v1028 = vpack.c.b16 %v938, %v937
        %v1029 = vpack.c.b16 %v940, %v939
        %v1030 = vpack.c.b16 %v942, %v941
        %v1031 = vpack.c.b16 %v944, %v943
        %v1032 = vpack.c.b16 %v946, %v945
        %v1033 = vpack.c.b16 %v948, %v947
        %v1034 = vpack.c.b16 %v950, %v949
        %v1035 = vpack.c.b16 %v952, %v951
        %v1036 = vpack.c.b16 %v954, %v953
        %v1037 = vpack.c.b16 %v956, %v955
        %v1038 = vpack.c.b16 %v958, %v957
        %v1039 = vpack.c.b16 %v960, %v959
        %v1040 = vpack.c.b16 %v962, %v961
        %v1041 = vpack.c.b16 %v964, %v963
        %v1042 = vpack.c.b16 %v966, %v965
        %v1043 = vpack.c.b16 %v968, %v967
        %v1044 = vpack.c.b16 %v970, %v969
        %v1045 = vpack.c.b16 %v972, %v971
        %v1046 = vpack.c.b16 %v974, %v973
        %v1047 = vpack.c.b16 %v976, %v975
        %v1048 = vpack.c.b16 %v978, %v977
        %v1049 = vpack.c.b16 %v980, %v979
        %v1050 = vpack.c.b16 %v982, %v981
        %v1051 = vpack.c.b16 %v984, %v983
        %v1052 = vpack.c.b16 %v986, %v985
        %v1053 = vpack.c.b16 %v988, %v987
        %v1054 = vpack.c.b16 %v990, %v989
        %1119 = vmatprep.subr.bf16.mxu0 0
        %1120 = vmatpush1.bf16.msra.mxu0 %v991
        %1121 = vmatprep.subr.bf16.mxu0 0
        %1122 = vmatpush1.bf16.msra.mxu0 %v992
        %1123 = vmatprep.subr.bf16.mxu0 0
        %1124 = vmatpush1.bf16.msra.mxu0 %v993
        %1125 = vmatprep.subr.bf16.mxu0 0
        %1126 = vmatpush1.bf16.msra.mxu0 %v994
        %1127 = vmatprep.subr.bf16.mxu0 0
        %1128 = vmatpush1.bf16.msra.mxu0 %v995
        %1129 = vmatprep.subr.bf16.mxu0 0
        %1130 = vmatpush1.bf16.msra.mxu0 %v996
        %1131 = vmatprep.subr.bf16.mxu0 0
        %1132 = vmatpush1.bf16.msra.mxu0 %v997
        %1133 = vmatprep.subr.bf16.mxu0 0
        %1134 = vmatpush1.bf16.msra.mxu0 %v998
        %1135 = vmatprep.subr.bf16.mxu0 0
        %1136 = vmatpush1.bf16.msra.mxu0 %v999
        %1137 = vmatprep.subr.bf16.mxu0 0
        %1138 = vmatpush1.bf16.msra.mxu0 %v1000
        %1139 = vmatprep.subr.bf16.mxu0 0
        %1140 = vmatpush1.bf16.msra.mxu0 %v1001
        %1141 = vmatprep.subr.bf16.mxu0 0
        %1142 = vmatpush1.bf16.msra.mxu0 %v1002
        %1143 = vmatprep.subr.bf16.mxu0 0
        %1144 = vmatpush1.bf16.msra.mxu0 %v1003
        %1145 = vmatprep.subr.bf16.mxu0 0
        %1146 = vmatpush1.bf16.msra.mxu0 %v1004
        %1147 = vmatprep.subr.bf16.mxu0 0
        %1148 = vmatpush1.bf16.msra.mxu0 %v1005
        %1149 = vmatprep.subr.bf16.mxu0 0
        %1150 = vmatpush1.bf16.msra.mxu0 %v1006
        %1151 = vmatprep.mubr.bf16.mxu0 %v593
        %1152 = vmatmul.mubr.bf16.gmra.mrb[0].mxu0 %v592
        %v1153 = vpop.f32.mrb[0].mxu0
        %v1154 = vadd.f32 %v733, %v1153
        %v1155 = vpop.f32.mrb[0].mxu0
        %v1156 = vpop.f32.mrb[0].mxu0
        %v1157 = vpop.f32.mrb[0].mxu0
        %1158 = vdwg.mxu0
        %1159 = vmatprep.subr.bf16.mxu0 0
        %1160 = vmatpush1.bf16.msra.mxu0 %v1007
        %1161 = vmatprep.subr.bf16.mxu0 0
        %1162 = vmatpush1.bf16.msra.mxu0 %v1008
        %1163 = vmatprep.subr.bf16.mxu0 0
        %1164 = vmatpush1.bf16.msra.mxu0 %v1009
        %1165 = vmatprep.subr.bf16.mxu0 0
        %1166 = vmatpush1.bf16.msra.mxu0 %v1010
        %1167 = vmatprep.subr.bf16.mxu0 0
        %1168 = vmatpush1.bf16.msra.mxu0 %v1011
        %1169 = vmatprep.subr.bf16.mxu0 0
        %1170 = vmatpush1.bf16.msra.mxu0 %v1012
        %1171 = vmatprep.subr.bf16.mxu0 0
        %1172 = vmatpush1.bf16.msra.mxu0 %v1013
        %1173 = vmatprep.subr.bf16.mxu0 0
        %1174 = vmatpush1.bf16.msra.mxu0 %v1014
        %1175 = vmatprep.subr.bf16.mxu0 0
        %1176 = vmatpush1.bf16.msra.mxu0 %v1015
        %1177 = vmatprep.subr.bf16.mxu0 0
        %1178 = vmatpush1.bf16.msra.mxu0 %v1016
        %1179 = vmatprep.subr.bf16.mxu0 0
        %1180 = vmatpush1.bf16.msra.mxu0 %v1017
        %1181 = vmatprep.subr.bf16.mxu0 0
        %1182 = vmatpush1.bf16.msra.mxu0 %v1018
        %1183 = vmatprep.subr.bf16.mxu0 0
        %1184 = vmatpush1.bf16.msra.mxu0 %v1019
        %1185 = vmatprep.subr.bf16.mxu0 0
        %1186 = vmatpush1.bf16.msra.mxu0 %v1020
        %1187 = vmatprep.subr.bf16.mxu0 0
        %1188 = vmatpush1.bf16.msra.mxu0 %v1021
        %1189 = vmatprep.subr.bf16.mxu0 0
        %1190 = vmatpush1.bf16.msra.mxu0 %v1022
        %1191 = vmatprep.mubr.bf16.mxu0 %v595
        %1192 = vmatmul.mubr.bf16.gmra.mrb[0].mxu0 %v594
        %v1193 = vpop.f32.mrb[0].mxu0
        %v1194 = vadd.f32 %v1154, %v1193
        %v1195 = vpop.f32.mrb[0].mxu0
        %v1196 = vpop.f32.mrb[0].mxu0
        %v1197 = vpop.f32.mrb[0].mxu0
        %1198 = vdwg.mxu0
        %1199 = vmatprep.subr.bf16.mxu0 0
        %1200 = vmatpush1.bf16.msra.mxu0 %v1023
        %1201 = vmatprep.subr.bf16.mxu0 0
        %1202 = vmatpush1.bf16.msra.mxu0 %v1024
        %1203 = vmatprep.subr.bf16.mxu0 0
        %1204 = vmatpush1.bf16.msra.mxu0 %v1025
        %1205 = vmatprep.subr.bf16.mxu0 0
        %1206 = vmatpush1.bf16.msra.mxu0 %v1026
        %1207 = vmatprep.subr.bf16.mxu0 0
        %1208 = vmatpush1.bf16.msra.mxu0 %v1027
        %1209 = vmatprep.subr.bf16.mxu0 0
        %1210 = vmatpush1.bf16.msra.mxu0 %v1028
        %1211 = vmatprep.subr.bf16.mxu0 0
        %1212 = vmatpush1.bf16.msra.mxu0 %v1029
        %1213 = vmatprep.subr.bf16.mxu0 0
        %1214 = vmatpush1.bf16.msra.mxu0 %v1030
        %1215 = vmatprep.subr.bf16.mxu0 0
        %1216 = vmatpush1.bf16.msra.mxu0 %v1031
        %1217 = vmatprep.subr.bf16.mxu0 0
        %1218 = vmatpush1.bf16.msra.mxu0 %v1032
        %1219 = vmatprep.subr.bf16.mxu0 0
        %1220 = vmatpush1.bf16.msra.mxu0 %v1033
        %1221 = vmatprep.subr.bf16.mxu0 0
        %1222 = vmatpush1.bf16.msra.mxu0 %v1034
        %1223 = vmatprep.subr.bf16.mxu0 0
        %1224 = vmatpush1.bf16.msra.mxu0 %v1035
        %1225 = vmatprep.subr.bf16.mxu0 0
        %1226 = vmatpush1.bf16.msra.mxu0 %v1036
        %1227 = vmatprep.subr.bf16.mxu0 0
        %1228 = vmatpush1.bf16.msra.mxu0 %v1037
        %1229 = vmatprep.subr.bf16.mxu0 0
        %1230 = vmatpush1.bf16.msra.mxu0 %v1038
        %1231 = vmatprep.mubr.bf16.mxu0 %v597
        %1232 = vmatmul.mubr.bf16.gmra.mrb[0].mxu0 %v596
        %v1233 = vpop.f32.mrb[0].mxu0
        %v1234 = vadd.f32 %v1194, %v1233
        %v1235 = vpop.f32.mrb[0].mxu0
        %v1236 = vpop.f32.mrb[0].mxu0
        %v1237 = vpop.f32.mrb[0].mxu0
        %1238 = vdwg.mxu0
        %1239 = vmatprep.subr.bf16.mxu0 0
        %1240 = vmatpush1.bf16.msra.mxu0 %v1039
        %1241 = vmatprep.subr.bf16.mxu0 0
        %1242 = vmatpush1.bf16.msra.mxu0 %v1040
        %1243 = vmatprep.subr.bf16.mxu0 0
        %1244 = vmatpush1.bf16.msra.mxu0 %v1041
        %1245 = vmatprep.subr.bf16.mxu0 0
        %1246 = vmatpush1.bf16.msra.mxu0 %v1042
        %1247 = vmatprep.subr.bf16.mxu0 0
        %1248 = vmatpush1.bf16.msra.mxu0 %v1043
        %1249 = vmatprep.subr.bf16.mxu0 0
        %1250 = vmatpush1.bf16.msra.mxu0 %v1044
        %1251 = vmatprep.subr.bf16.mxu0 0
        %1252 = vmatpush1.bf16.msra.mxu0 %v1045
        %1253 = vmatprep.subr.bf16.mxu0 0
        %1254 = vmatpush1.bf16.msra.mxu0 %v1046
        %1255 = vmatprep.subr.bf16.mxu0 0
        %1256 = vmatpush1.bf16.msra.mxu0 %v1047
        %1257 = vmatprep.subr.bf16.mxu0 0
        %1258 = vmatpush1.bf16.msra.mxu0 %v1048
        %1259 = vmatprep.subr.bf16.mxu0 0
        %1260 = vmatpush1.bf16.msra.mxu0 %v1049
        %1261 = vmatprep.subr.bf16.mxu0 0
        %1262 = vmatpush1.bf16.msra.mxu0 %v1050
        %1263 = vmatprep.subr.bf16.mxu0 0
        %1264 = vmatpush1.bf16.msra.mxu0 %v1051
        %1265 = vmatprep.subr.bf16.mxu0 0
        %1266 = vmatpush1.bf16.msra.mxu0 %v1052
        %1267 = vmatprep.subr.bf16.mxu0 0
        %1268 = vmatpush1.bf16.msra.mxu0 %v1053
        %1269 = vmatprep.subr.bf16.mxu0 0
        %1270 = vmatpush1.bf16.msra.mxu0 %v1054
        %1271 = vmatprep.mubr.bf16.mxu0 %v599
        %1272 = vmatmul.mubr.bf16.gmra.mrb[0].mxu0 %v598
        %v1273 = vpop.f32.mrb[0].mxu0
        %v1274 = vadd.f32 %v1234, %v1273
        %v1275 = vpop.f32.mrb[0].mxu0
        %v1276 = vpop.f32.mrb[0].mxu0
        %v1277 = vpop.f32.mrb[0].mxu0
        %1278 = vdwg.mxu0
        %v1279 = vmax.f32 %v1274, 0.0
        %v1280 = vld [vmem:[%s10] sm:$0x3]
        %s1281 = smul.u32 %s33, 8
        %v1282 = vlaneseq
        %v1283 = vand.u32 %v1282, 127
        %v1284 = vstv %s1281
        %v1285 = vadd.s32 %v1284, %v1283
        %v1286 = vlaneseq
        %v1287 = vshrl.u32 %v1286, 7
        %v1288 = vmul.u32 %v1287, 8
        %vm1289 = vcmp.lt.s32.totalorder %v1280, 8
        %v1290 = vsel %vm1289, %v1280, 8
        %1291 = vset.pattern.permute.xlu0 0
        %1292 = vperm.xlu0 %1291, %v1290
        %v1293 = vpop.permute.xlu0 %1292
        %v1294 = vadd.s32 %v1288, %v1293
        %vm1295 = vcmp.ge.s32.totalorder %v1285, %v1288
        %vm1296 = vcmp.lt.s32.totalorder %v1285, %v1294
        %vm1297 = vmand %vm1295, %vm1296
        %v1298 = vcvt.s32.f32 %v1280
        %v1299 = vmax.f32 %v1298, 1.0
        %v1300 = vrcp.pop %v1299
        %v1301 = vmul.f32 1.0, %v1300
        %v1302 = vsel %vm1297, 1, 0
        %v1303 = vcvt.s32.f32 %v1302
        %1305 = vset.pattern.permute.xlu0 0
        %1306 = vperm.xlu0 %1305, %v1301
        %v1307 = vpop.permute.xlu0 %1306
        %v1309 = vmul.f32 %v1303, %v1307
        %v1310 = vld [vmem:[#allocation2] sm:$0x3]
        %vm1311 = vcmask 64512
        %v1313 = vsel %vm1311, %v1309, 0
        %1315 = vmatprep.subr.mxu0 0.0
        %1316 = vmatpush1.msra.mxu0 %v1279
        %1317 = vmatprep.subr.mxu0 0.0
        %1318 = vmatpush1.msra.mxu0 0.0
        %1319 = vmatprep.subr.mxu0 0.0
        %1320 = vmatpush1.msra.mxu0 0.0
        %1321 = vmatprep.subr.mxu0 0.0
        %1322 = vmatpush1.msra.mxu0 0.0
        %1323 = vmatprep.subr.mxu0 0.0
        %1324 = vmatpush1.msra.mxu0 0.0
        %1325 = vmatprep.subr.mxu0 0.0
        %1326 = vmatpush1.msra.mxu0 0.0
        %1327 = vmatprep.subr.mxu0 0.0
        %1328 = vmatpush1.msra.mxu0 0.0
        %1329 = vmatprep.subr.mxu0 0.0
        %1330 = vmatpush1.msra.mxu0 0.0
        %1331 = vmatprep.subr.mxu0 0.0
        %1332 = vmatpush1.msra.mxu0 0.0
        %1333 = vmatprep.subr.mxu0 0.0
        %1334 = vmatpush1.msra.mxu0 0.0
        %1335 = vmatprep.subr.mxu0 0.0
        %1336 = vmatpush1.msra.mxu0 0.0
        %1337 = vmatprep.subr.mxu0 0.0
        %1338 = vmatpush1.msra.mxu0 0.0
        %1339 = vmatprep.subr.mxu0 0.0
        %1340 = vmatpush1.msra.mxu0 0.0
        %1341 = vmatprep.subr.mxu0 0.0
        %1342 = vmatpush1.msra.mxu0 0.0
        %1343 = vmatprep.subr.mxu0 0.0
        %1344 = vmatpush1.msra.mxu0 0.0
        %1345 = vmatprep.subr.mxu0 0.0
        %1346 = vmatpush1.msra.mxu0 0.0
        %1347 = vmatprep.subr.mxu0 0.0
        %1348 = vmatpush1.msra.mxu0 0.0
        %1349 = vmatprep.subr.mxu0 0.0
        %1350 = vmatpush1.msra.mxu0 0.0
        %1351 = vmatprep.subr.mxu0 0.0
        %1352 = vmatpush1.msra.mxu0 0.0
        %1353 = vmatprep.subr.mxu0 0.0
        %1354 = vmatpush1.msra.mxu0 0.0
        %1355 = vmatprep.subr.mxu0 0.0
        %1356 = vmatpush1.msra.mxu0 0.0
        %1357 = vmatprep.subr.mxu0 0.0
        %1358 = vmatpush1.msra.mxu0 0.0
        %1359 = vmatprep.subr.mxu0 0.0
        %1360 = vmatpush1.msra.mxu0 0.0
        %1361 = vmatprep.subr.mxu0 0.0
        %1362 = vmatpush1.msra.mxu0 0.0
        %1363 = vmatprep.subr.mxu0 0.0
        %1364 = vmatpush1.msra.mxu0 0.0
        %1365 = vmatprep.subr.mxu0 0.0
        %1366 = vmatpush1.msra.mxu0 0.0
        %1367 = vmatprep.subr.mxu0 0.0
        %1368 = vmatpush1.msra.mxu0 0.0
        %1369 = vmatprep.subr.mxu0 0.0
        %1370 = vmatpush1.msra.mxu0 0.0
        %1371 = vmatprep.subr.mxu0 0.0
        %1372 = vmatpush1.msra.mxu0 0.0
        %1373 = vmatprep.subr.mxu0 0.0
        %1374 = vmatpush1.msra.mxu0 0.0
        %1375 = vmatprep.subr.mxu0 0.0
        %1376 = vmatpush1.msra.mxu0 0.0
        %1377 = vmatprep.subr.mxu0 0.0
        %1378 = vmatpush1.msra.mxu0 0.0
        %1379 = vmatprep.mubr.f32.mxu0 0.0
        %1380 = vmatmul.mubr.f32.gmra.mrb[0].mxu0 %v1313
        %v1381 = vpop.f32.mrb[0].mxu0
        %v1382 = vadd.f32 0.0, %v1381
        %v1383 = vpop.f32.mrb[0].mxu0
        %1384 = vdwg.mxu0
        %v1385 = vadd.f32 %v1310, %v1382
        %1386 = vst [vmem:[#allocation2] sm:$0x3] %v1385
        %p1387 = scmp.eq.s32.totalorder %s33, 1
        // Predicated region
        $region101: #{unified_model_forward.1} parent=83 // pred_check
          %p1388 = pneg %p1387
        $region102: #{unified_model_forward.1} parent=83 // pred_check_branch
          %1390 = sbr.rel (%p1388) target = $region104
        $region103: #{unified_model_forward.1} parent=83 // pred_region
          %v1391 = vld [vmem:[#allocation2] sm:$0x3]
          %v1392 = vld [vmem:[%s14] sm:$0xff]
          %v1393 = vld [vmem:[%s14 + $0x8] sm:$0xff]
          %v1394 = vld [vmem:[%s14 + $0x10] sm:$0xff]
          %v1395 = vld [vmem:[%s14 + $0x18] sm:$0xff]
          %v1396 = vld [vmem:[%s14 + $0x20] sm:$0xff]
          %v1397 = vld [vmem:[%s14 + $0x28] sm:$0xff]
          %v1398 = vld [vmem:[%s14 + $0x30] sm:$0xff]
          %v1399 = vld [vmem:[%s14 + $0x38] sm:$0xff]
          %v1400 = vld [vmem:[%s14 + $0x40] sm:$0xff]
          %v1401 = vld [vmem:[%s14 + $0x48] sm:$0xff]
          %v1402 = vld [vmem:[%s14 + $0x50] sm:$0xff]
          %v1403 = vld [vmem:[%s14 + $0x58] sm:$0xff]
          %v1404 = vld [vmem:[%s14 + $0x60] sm:$0xff]
          %v1405 = vld [vmem:[%s14 + $0x68] sm:$0xff]
          %v1406 = vld [vmem:[%s14 + $0x70] sm:$0xff]
          %v1407 = vld [vmem:[%s14 + $0x78] sm:$0xff]
          %v1408 = vld [vmem:[%s15] sm:$0x1]
          %v1410 = vlaneseq
          %v1411 = vshrl.u32 %v1410, 7
          %v1412 = vsub.s32 0, %v1411
          %v1413 = vrot.slane %v1408, %v1412
          %1415 = vmatprep.subr.mxu0 0.0
          %1416 = vmatpush1.msra.mxu0 %v1392
          %1417 = vmatprep.subr.mxu0 0.0
          %1418 = vmatpush1.msra.mxu0 %v1393
          %1419 = vmatprep.subr.mxu0 0.0
          %1420 = vmatpush1.msra.mxu0 %v1394
          %1421 = vmatprep.subr.mxu0 0.0
          %1422 = vmatpush1.msra.mxu0 %v1395
          %1423 = vmatprep.subr.mxu0 0.0
          %1424 = vmatpush1.msra.mxu0 %v1396
          %1425 = vmatprep.subr.mxu0 0.0
          %1426 = vmatpush1.msra.mxu0 %v1397
          %1427 = vmatprep.subr.mxu0 0.0
          %1428 = vmatpush1.msra.mxu0 %v1398
          %1429 = vmatprep.subr.mxu0 0.0
          %1430 = vmatpush1.msra.mxu0 %v1399
          %1431 = vmatprep.subr.mxu0 0.0
          %1432 = vmatpush1.msra.mxu0 %v1400
          %1433 = vmatprep.subr.mxu0 0.0
          %1434 = vmatpush1.msra.mxu0 %v1401
          %1435 = vmatprep.subr.mxu0 0.0
          %1436 = vmatpush1.msra.mxu0 %v1402
          %1437 = vmatprep.subr.mxu0 0.0
          %1438 = vmatpush1.msra.mxu0 %v1403
          %1439 = vmatprep.subr.mxu0 0.0
          %1440 = vmatpush1.msra.mxu0 %v1404
          %1441 = vmatprep.subr.mxu0 0.0
          %1442 = vmatpush1.msra.mxu0 %v1405
          %1443 = vmatprep.subr.mxu0 0.0
          %1444 = vmatpush1.msra.mxu0 %v1406
          %1445 = vmatprep.subr.mxu0 0.0
          %1446 = vmatpush1.msra.mxu0 %v1407
          %1447 = vmatprep.subr.mxu0 0.0
          %1448 = vmatpush1.msra.mxu0 0.0
          %1449 = vmatprep.subr.mxu0 0.0
          %1450 = vmatpush1.msra.mxu0 0.0
          %1451 = vmatprep.subr.mxu0 0.0
          %1452 = vmatpush1.msra.mxu0 0.0
          %1453 = vmatprep.subr.mxu0 0.0
          %1454 = vmatpush1.msra.mxu0 0.0
          %1455 = vmatprep.subr.mxu0 0.0
          %1456 = vmatpush1.msra.mxu0 0.0
          %1457 = vmatprep.subr.mxu0 0.0
          %1458 = vmatpush1.msra.mxu0 0.0
          %1459 = vmatprep.subr.mxu0 0.0
          %1460 = vmatpush1.msra.mxu0 0.0
          %1461 = vmatprep.subr.mxu0 0.0
          %1462 = vmatpush1.msra.mxu0 0.0
          %1463 = vmatprep.subr.mxu0 0.0
          %1464 = vmatpush1.msra.mxu0 0.0
          %1465 = vmatprep.subr.mxu0 0.0
          %1466 = vmatpush1.msra.mxu0 0.0
          %1467 = vmatprep.subr.mxu0 0.0
          %1468 = vmatpush1.msra.mxu0 0.0
          %1469 = vmatprep.subr.mxu0 0.0
          %1470 = vmatpush1.msra.mxu0 0.0
          %1471 = vmatprep.subr.mxu0 0.0
          %1472 = vmatpush1.msra.mxu0 0.0
          %1473 = vmatprep.subr.mxu0 0.0
          %1474 = vmatpush1.msra.mxu0 0.0
          %1475 = vmatprep.subr.mxu0 0.0
          %1476 = vmatpush1.msra.mxu0 0.0
          %1477 = vmatprep.subr.mxu0 0.0
          %1478 = vmatpush1.msra.mxu0 0.0
          %1479 = vmatprep.mubr.f32.mxu0 0.0
          %1480 = vmatmul.mubr.f32.gmra.mrb[0].mxu0 %v1391
          %v1481 = vpop.f32.mrb[0].mxu0
          %v1482 = vadd.f32 %v1413, %v1481
          %v1483 = vpop.f32.mrb[0].mxu0
          %1484 = vdwg.mxu0
          %1485 = vst [vmem:[#allocation10] sm:$0x3] %v1482
          %v1486 = vld [vmem:[#allocation3] sm:$0xff]
          %v1487 = vld [vmem:[#allocation3 + $0x8] sm:$0xff]
          %v1488 = vld [vmem:[%s2] sm:$0xff]
          %v1489 = vld [vmem:[%s2 + $0x8] sm:$0xff]
          %v1490 = vld [vmem:[%s2 + $0x10] sm:$0xff]
          %v1491 = vld [vmem:[%s2 + $0x18] sm:$0xff]
          %v1492 = vld [vmem:[#allocation6] sm:$0xff]
          %v1493 = vld [vmem:[#allocation6 + $0x8] sm:$0xff]
          %v1494 = vld [vmem:[#allocation8] sm:$0xff]
          %v1495 = vld [vmem:[#allocation8 + $0x8] sm:$0xff]
          %v1496 = vld [vmem:[#allocation8 + $0x10] sm:$0xff]
          %v1497 = vld [vmem:[#allocation8 + $0x18] sm:$0xff]
          %vm1498 = vcmask 261120
          %v1500 = vsel %vm1498, %v1492, 0
          %v1503 = vsel %vm1498, %v1493, 0
          %1505 = vmatprep.subr.mxu0 0.0
          %1506 = vmatpush1.msra.mxu0 %v1494
          %1507 = vmatprep.subr.mxu0 0.0
          %1508 = vmatpush1.msra.mxu0 %v1495
          %1509 = vmatprep.subr.mxu0 0.0
          %1510 = vmatpush1.msra.mxu0 %v1496
          %1511 = vmatprep.subr.mxu0 0.0
          %1512 = vmatpush1.msra.mxu0 %v1497
          %1513 = vmatprep.subr.mxu0 0.0
          %1514 = vmatpush1.msra.mxu0 0.0
          %1515 = vmatprep.subr.mxu0 0.0
          %1516 = vmatpush1.msra.mxu0 0.0
          %1517 = vmatprep.subr.mxu0 0.0
          %1518 = vmatpush1.msra.mxu0 0.0
          %1519 = vmatprep.subr.mxu0 0.0
          %1520 = vmatpush1.msra.mxu0 0.0
          %1521 = vmatprep.subr.mxu0 0.0
          %1522 = vmatpush1.msra.mxu0 0.0
          %1523 = vmatprep.subr.mxu0 0.0
          %1524 = vmatpush1.msra.mxu0 0.0
          %1525 = vmatprep.subr.mxu0 0.0
          %1526 = vmatpush1.msra.mxu0 0.0
          %1527 = vmatprep.subr.mxu0 0.0
          %1528 = vmatpush1.msra.mxu0 0.0
          %1529 = vmatprep.subr.mxu0 0.0
          %1530 = vmatpush1.msra.mxu0 0.0
          %1531 = vmatprep.subr.mxu0 0.0
          %1532 = vmatpush1.msra.mxu0 0.0
          %1533 = vmatprep.subr.mxu0 0.0
          %1534 = vmatpush1.msra.mxu0 0.0
          %1535 = vmatprep.subr.mxu0 0.0
          %1536 = vmatpush1.msra.mxu0 0.0
          %1537 = vmatprep.subr.mxu0 0.0
          %1538 = vmatpush1.msra.mxu0 0.0
          %1539 = vmatprep.subr.mxu0 0.0
          %1540 = vmatpush1.msra.mxu0 0.0
          %1541 = vmatprep.subr.mxu0 0.0
          %1542 = vmatpush1.msra.mxu0 0.0
          %1543 = vmatprep.subr.mxu0 0.0
          %1544 = vmatpush1.msra.mxu0 0.0
          %1545 = vmatprep.subr.mxu0 0.0
          %1546 = vmatpush1.msra.mxu0 0.0
          %1547 = vmatprep.subr.mxu0 0.0
          %1548 = vmatpush1.msra.mxu0 0.0
          %1549 = vmatprep.subr.mxu0 0.0
          %1550 = vmatpush1.msra.mxu0 0.0
          %1551 = vmatprep.subr.mxu0 0.0
          %1552 = vmatpush1.msra.mxu0 0.0
          %1553 = vmatprep.subr.mxu0 0.0
          %1554 = vmatpush1.msra.mxu0 0.0
          %1555 = vmatprep.subr.mxu0 0.0
          %1556 = vmatpush1.msra.mxu0 0.0
          %1557 = vmatprep.subr.mxu0 0.0
          %1558 = vmatpush1.msra.mxu0 0.0
          %1559 = vmatprep.subr.mxu0 0.0
          %1560 = vmatpush1.msra.mxu0 0.0
          %1561 = vmatprep.subr.mxu0 0.0
          %1562 = vmatpush1.msra.mxu0 0.0
          %1563 = vmatprep.subr.mxu0 0.0
          %1564 = vmatpush1.msra.mxu0 0.0
          %1565 = vmatprep.subr.mxu0 0.0
          %1566 = vmatpush1.msra.mxu0 0.0
          %1567 = vmatprep.subr.mxu0 0.0
          %1568 = vmatpush1.msra.mxu0 0.0
          %1569 = vmatprep.mubr.f32.mxu0 0.0
          %1570 = vmatmul.mubr.f32.gmra.mrb[0].mxu0 %v1500
          %v1571 = vpop.f32.mrb[0].mxu0
          %v1572 = vadd.f32 0.0, %v1571
          %v1573 = vpop.f32.mrb[0].mxu0
          %1574 = vmatprep.mubr.f32.mxu0 0.0
          %1575 = vmatmul.mubr.f32.gmra.mrb[0].mxu0 %v1503
          %v1576 = vpop.f32.mrb[0].mxu0
          %v1577 = vadd.f32 0.0, %v1576
          %v1578 = vpop.f32.mrb[0].mxu0
          %1579 = vdwg.mxu0
          %v1581 = vsel %vm1498, %v1486, 0
          %v1584 = vsel %vm1498, %v1487, 0
          %1586 = vmatprep.subr.mxu0 0.0
          %1587 = vmatpush1.msra.mxu0 %v1488
          %1588 = vmatprep.subr.mxu0 0.0
          %1589 = vmatpush1.msra.mxu0 %v1489
          %1590 = vmatprep.subr.mxu0 0.0
          %1591 = vmatpush1.msra.mxu0 %v1490
          %1592 = vmatprep.subr.mxu0 0.0
          %1593 = vmatpush1.msra.mxu0 %v1491
          %1594 = vmatprep.subr.mxu0 0.0
          %1595 = vmatpush1.msra.mxu0 0.0
          %1596 = vmatprep.subr.mxu0 0.0
          %1597 = vmatpush1.msra.mxu0 0.0
          %1598 = vmatprep.subr.mxu0 0.0
          %1599 = vmatpush1.msra.mxu0 0.0
          %1600 = vmatprep.subr.mxu0 0.0
          %1601 = vmatpush1.msra.mxu0 0.0
          %1602 = vmatprep.subr.mxu0 0.0
          %1603 = vmatpush1.msra.mxu0 0.0
          %1604 = vmatprep.subr.mxu0 0.0
          %1605 = vmatpush1.msra.mxu0 0.0
          %1606 = vmatprep.subr.mxu0 0.0
          %1607 = vmatpush1.msra.mxu0 0.0
          %1608 = vmatprep.subr.mxu0 0.0
          %1609 = vmatpush1.msra.mxu0 0.0
          %1610 = vmatprep.subr.mxu0 0.0
          %1611 = vmatpush1.msra.mxu0 0.0
          %1612 = vmatprep.subr.mxu0 0.0
          %1613 = vmatpush1.msra.mxu0 0.0
          %1614 = vmatprep.subr.mxu0 0.0
          %1615 = vmatpush1.msra.mxu0 0.0
          %1616 = vmatprep.subr.mxu0 0.0
          %1617 = vmatpush1.msra.mxu0 0.0
          %1618 = vmatprep.subr.mxu0 0.0
          %1619 = vmatpush1.msra.mxu0 0.0
          %1620 = vmatprep.subr.mxu0 0.0
          %1621 = vmatpush1.msra.mxu0 0.0
          %1622 = vmatprep.subr.mxu0 0.0
          %1623 = vmatpush1.msra.mxu0 0.0
          %1624 = vmatprep.subr.mxu0 0.0
          %1625 = vmatpush1.msra.mxu0 0.0
          %1626 = vmatprep.subr.mxu0 0.0
          %1627 = vmatpush1.msra.mxu0 0.0
          %1628 = vmatprep.subr.mxu0 0.0
          %1629 = vmatpush1.msra.mxu0 0.0
          %1630 = vmatprep.subr.mxu0 0.0
          %1631 = vmatpush1.msra.mxu0 0.0
          %1632 = vmatprep.subr.mxu0 0.0
          %1633 = vmatpush1.msra.mxu0 0.0
          %1634 = vmatprep.subr.mxu0 0.0
          %1635 = vmatpush1.msra.mxu0 0.0
          %1636 = vmatprep.subr.mxu0 0.0
          %1637 = vmatpush1.msra.mxu0 0.0
          %1638 = vmatprep.subr.mxu0 0.0
          %1639 = vmatpush1.msra.mxu0 0.0
          %1640 = vmatprep.subr.mxu0 0.0
          %1641 = vmatpush1.msra.mxu0 0.0
          %1642 = vmatprep.subr.mxu0 0.0
          %1643 = vmatpush1.msra.mxu0 0.0
          %1644 = vmatprep.subr.mxu0 0.0
          %1645 = vmatpush1.msra.mxu0 0.0
          %1646 = vmatprep.subr.mxu0 0.0
          %1647 = vmatpush1.msra.mxu0 0.0
          %1648 = vmatprep.subr.mxu0 0.0
          %1649 = vmatpush1.msra.mxu0 0.0
          %1650 = vmatprep.mubr.f32.mxu0 0.0
          %1651 = vmatmul.mubr.f32.gmra.mrb[0].mxu0 %v1581
          %v1652 = vpop.f32.mrb[0].mxu0
          %v1653 = vadd.f32 %v1572, %v1652
          %v1654 = vpop.f32.mrb[0].mxu0
          %1655 = vmatprep.mubr.f32.mxu0 0.0
          %1656 = vmatmul.mubr.f32.gmra.mrb[0].mxu0 %v1584
          %v1657 = vpop.f32.mrb[0].mxu0
          %v1658 = vadd.f32 %v1577, %v1657
          %v1659 = vpop.f32.mrb[0].mxu0
          %1660 = vdwg.mxu0
          %v1661 = vld [vmem:[%s4] sm:$0x1]
          %v1663 = vlaneseq
          %v1664 = vshrl.u32 %v1663, 7
          %v1665 = vsub.s32 0, %v1664
          %v1666 = vrot.slane %v1661, %v1665
          %v1668 = vadd.f32 %v1653, %v1666
          %v1669 = vadd.f32 %v1658, %v1666
          %v1670 = vtanh.pop %v1668
          %v1671 = vtanh.pop %v1669
          %v1672 = vld [vmem:[%s5] sm:$0xff]
          %v1673 = vld [vmem:[%s5 + $0x8] sm:$0xff]
          %v1674 = vld [vmem:[%s5 + $0x10] sm:$0xff]
          %v1675 = vld [vmem:[%s5 + $0x18] sm:$0xff]
          %v1676 = vld [vmem:[%s5 + $0x20] sm:$0xff]
          %v1677 = vld [vmem:[%s5 + $0x28] sm:$0xff]
          %v1678 = vld [vmem:[%s5 + $0x30] sm:$0xff]
          %v1679 = vld [vmem:[%s5 + $0x38] sm:$0xff]
          %v1680 = vld [vmem:[%s5 + $0x40] sm:$0xff]
          %v1681 = vld [vmem:[%s5 + $0x48] sm:$0xff]
          %v1682 = vld [vmem:[%s5 + $0x50] sm:$0xff]
          %v1683 = vld [vmem:[%s5 + $0x58] sm:$0xff]
          %v1684 = vld [vmem:[%s5 + $0x60] sm:$0xff]
          %v1685 = vld [vmem:[%s5 + $0x68] sm:$0xff]
          %v1686 = vld [vmem:[%s5 + $0x70] sm:$0xff]
          %v1687 = vld [vmem:[%s5 + $0x78] sm:$0xff]
          %1688 = vmatprep.subr.mxu0 0.0
          %1689 = vmatpush1.msra.mxu0 %v1672
          %1690 = vmatprep.subr.mxu0 0.0
          %1691 = vmatpush1.msra.mxu0 %v1673
          %1692 = vmatprep.subr.mxu0 0.0
          %1693 = vmatpush1.msra.mxu0 %v1674
          %1694 = vmatprep.subr.mxu0 0.0
          %1695 = vmatpush1.msra.mxu0 %v1675
          %1696 = vmatprep.subr.mxu0 0.0
          %1697 = vmatpush1.msra.mxu0 %v1676
          %1698 = vmatprep.subr.mxu0 0.0
          %1699 = vmatpush1.msra.mxu0 %v1677
          %1700 = vmatprep.subr.mxu0 0.0
          %1701 = vmatpush1.msra.mxu0 %v1678
          %1702 = vmatprep.subr.mxu0 0.0
          %1703 = vmatpush1.msra.mxu0 %v1679
          %1704 = vmatprep.subr.mxu0 0.0
          %1705 = vmatpush1.msra.mxu0 %v1680
          %1706 = vmatprep.subr.mxu0 0.0
          %1707 = vmatpush1.msra.mxu0 %v1681
          %1708 = vmatprep.subr.mxu0 0.0
          %1709 = vmatpush1.msra.mxu0 %v1682
          %1710 = vmatprep.subr.mxu0 0.0
          %1711 = vmatpush1.msra.mxu0 %v1683
          %1712 = vmatprep.subr.mxu0 0.0
          %1713 = vmatpush1.msra.mxu0 %v1684
          %1714 = vmatprep.subr.mxu0 0.0
          %1715 = vmatpush1.msra.mxu0 %v1685
          %1716 = vmatprep.subr.mxu0 0.0
          %1717 = vmatpush1.msra.mxu0 %v1686
          %1718 = vmatprep.subr.mxu0 0.0
          %1719 = vmatpush1.msra.mxu0 %v1687
          %1720 = vmatprep.subr.mxu0 0.0
          %1721 = vmatpush1.msra.mxu0 0.0
          %1722 = vmatprep.subr.mxu0 0.0
          %1723 = vmatpush1.msra.mxu0 0.0
          %1724 = vmatprep.subr.mxu0 0.0
          %1725 = vmatpush1.msra.mxu0 0.0
          %1726 = vmatprep.subr.mxu0 0.0
          %1727 = vmatpush1.msra.mxu0 0.0
          %1728 = vmatprep.subr.mxu0 0.0
          %1729 = vmatpush1.msra.mxu0 0.0
          %1730 = vmatprep.subr.mxu0 0.0
          %1731 = vmatpush1.msra.mxu0 0.0
          %1732 = vmatprep.subr.mxu0 0.0
          %1733 = vmatpush1.msra.mxu0 0.0
          %1734 = vmatprep.subr.mxu0 0.0
          %1735 = vmatpush1.msra.mxu0 0.0
          %1736 = vmatprep.subr.mxu0 0.0
          %1737 = vmatpush1.msra.mxu0 0.0
          %1738 = vmatprep.subr.mxu0 0.0
          %1739 = vmatpush1.msra.mxu0 0.0
          %1740 = vmatprep.subr.mxu0 0.0
          %1741 = vmatpush1.msra.mxu0 0.0
          %1742 = vmatprep.subr.mxu0 0.0
          %1743 = vmatpush1.msra.mxu0 0.0
          %1744 = vmatprep.subr.mxu0 0.0
          %1745 = vmatpush1.msra.mxu0 0.0
          %1746 = vmatprep.subr.mxu0 0.0
          %1747 = vmatpush1.msra.mxu0 0.0
          %1748 = vmatprep.subr.mxu0 0.0
          %1749 = vmatpush1.msra.mxu0 0.0
          %1750 = vmatprep.subr.mxu0 0.0
          %1751 = vmatpush1.msra.mxu0 0.0
          %1752 = vmatprep.mubr.f32.mxu0 0.0
          %1753 = vmatmul.mubr.f32.gmra.mrb[0].mxu0 %v1670
          %v1754 = vpop.f32.mrb[0].mxu0
          %v1755 = vadd.f32 0.0, %v1754
          %v1756 = vpop.f32.mrb[0].mxu0
          %1757 = vmatprep.mubr.f32.mxu0 0.0
          %1758 = vmatmul.mubr.f32.gmra.mrb[0].mxu0 %v1671
          %v1759 = vpop.f32.mrb[0].mxu0
          %v1760 = vadd.f32 0.0, %v1759
          %v1761 = vpop.f32.mrb[0].mxu0
          %1762 = vdwg.mxu0
          %v1763 = vld [vmem:[%s6] sm:$0xff]
          %v1764 = vld [vmem:[%s6 + $0x8] sm:$0xff]
          %v1765 = vld [vmem:[%s6 + $0x10] sm:$0xff]
          %v1766 = vld [vmem:[%s6 + $0x18] sm:$0xff]
          %v1767 = vld [vmem:[%s6 + $0x20] sm:$0xff]
          %v1768 = vld [vmem:[%s6 + $0x28] sm:$0xff]
          %v1769 = vld [vmem:[%s6 + $0x30] sm:$0xff]
          %v1770 = vld [vmem:[%s6 + $0x38] sm:$0xff]
          %v1771 = vld [vmem:[%s6 + $0x40] sm:$0xff]
          %v1772 = vld [vmem:[%s6 + $0x48] sm:$0xff]
          %v1773 = vld [vmem:[%s6 + $0x50] sm:$0xff]
          %v1774 = vld [vmem:[%s6 + $0x58] sm:$0xff]
          %v1775 = vld [vmem:[%s6 + $0x60] sm:$0xff]
          %v1776 = vld [vmem:[%s6 + $0x68] sm:$0xff]
          %v1777 = vld [vmem:[%s6 + $0x70] sm:$0xff]
          %v1778 = vld [vmem:[%s6 + $0x78] sm:$0xff]
          %1779 = vmatprep.subr.mxu0 0.0
          %1780 = vmatpush1.msra.mxu0 %v1763
          %1781 = vmatprep.subr.mxu0 0.0
          %1782 = vmatpush1.msra.mxu0 %v1764
          %1783 = vmatprep.subr.mxu0 0.0
          %1784 = vmatpush1.msra.mxu0 %v1765
          %1785 = vmatprep.subr.mxu0 0.0
          %1786 = vmatpush1.msra.mxu0 %v1766
          %1787 = vmatprep.subr.mxu0 0.0
          %1788 = vmatpush1.msra.mxu0 %v1767
          %1789 = vmatprep.subr.mxu0 0.0
          %1790 = vmatpush1.msra.mxu0 %v1768
          %1791 = vmatprep.subr.mxu0 0.0
          %1792 = vmatpush1.msra.mxu0 %v1769
          %1793 = vmatprep.subr.mxu0 0.0
          %1794 = vmatpush1.msra.mxu0 %v1770
          %1795 = vmatprep.subr.mxu0 0.0
          %1796 = vmatpush1.msra.mxu0 %v1771
          %1797 = vmatprep.subr.mxu0 0.0
          %1798 = vmatpush1.msra.mxu0 %v1772
          %1799 = vmatprep.subr.mxu0 0.0
          %1800 = vmatpush1.msra.mxu0 %v1773
          %1801 = vmatprep.subr.mxu0 0.0
          %1802 = vmatpush1.msra.mxu0 %v1774
          %1803 = vmatprep.subr.mxu0 0.0
          %1804 = vmatpush1.msra.mxu0 %v1775
          %1805 = vmatprep.subr.mxu0 0.0
          %1806 = vmatpush1.msra.mxu0 %v1776
          %1807 = vmatprep.subr.mxu0 0.0
          %1808 = vmatpush1.msra.mxu0 %v1777
          %1809 = vmatprep.subr.mxu0 0.0
          %1810 = vmatpush1.msra.mxu0 %v1778
          %1811 = vmatprep.subr.mxu0 0.0
          %1812 = vmatpush1.msra.mxu0 0.0
          %1813 = vmatprep.subr.mxu0 0.0
          %1814 = vmatpush1.msra.mxu0 0.0
          %1815 = vmatprep.subr.mxu0 0.0
          %1816 = vmatpush1.msra.mxu0 0.0
          %1817 = vmatprep.subr.mxu0 0.0
          %1818 = vmatpush1.msra.mxu0 0.0
          %1819 = vmatprep.subr.mxu0 0.0
          %1820 = vmatpush1.msra.mxu0 0.0
          %1821 = vmatprep.subr.mxu0 0.0
          %1822 = vmatpush1.msra.mxu0 0.0
          %1823 = vmatprep.subr.mxu0 0.0
          %1824 = vmatpush1.msra.mxu0 0.0
          %1825 = vmatprep.subr.mxu0 0.0
          %1826 = vmatpush1.msra.mxu0 0.0
          %1827 = vmatprep.subr.mxu0 0.0
          %1828 = vmatpush1.msra.mxu0 0.0
          %1829 = vmatprep.subr.mxu0 0.0
          %1830 = vmatpush1.msra.mxu0 0.0
          %1831 = vmatprep.subr.mxu0 0.0
          %1832 = vmatpush1.msra.mxu0 0.0
          %1833 = vmatprep.subr.mxu0 0.0
          %1834 = vmatpush1.msra.mxu0 0.0
          %1835 = vmatprep.subr.mxu0 0.0
          %1836 = vmatpush1.msra.mxu0 0.0
          %1837 = vmatprep.subr.mxu0 0.0
          %1838 = vmatpush1.msra.mxu0 0.0
          %1839 = vmatprep.subr.mxu0 0.0
          %1840 = vmatpush1.msra.mxu0 0.0
          %1841 = vmatprep.subr.mxu0 0.0
          %1842 = vmatpush1.msra.mxu0 0.0
          %1843 = vmatprep.mubr.f32.mxu0 0.0
          %1844 = vmatmul.mubr.f32.gmra.mrb[0].mxu0 %v1670
          %v1845 = vpop.f32.mrb[0].mxu0
          %v1846 = vadd.f32 0.0, %v1845
          %v1847 = vpop.f32.mrb[0].mxu0
          %1848 = vmatprep.mubr.f32.mxu0 0.0
          %1849 = vmatmul.mubr.f32.gmra.mrb[0].mxu0 %v1671
          %v1850 = vpop.f32.mrb[0].mxu0
          %v1851 = vadd.f32 0.0, %v1850
          %v1852 = vpop.f32.mrb[0].mxu0
          %1853 = vdwg.mxu0
          %v1854 = vld [vmem:[%s7] sm:$0xff]
          %v1855 = vld [vmem:[%s7 + $0x8] sm:$0xff]
          %v1856 = vld [vmem:[%s7 + $0x10] sm:$0xff]
          %v1857 = vld [vmem:[%s7 + $0x18] sm:$0xff]
          %v1858 = vld [vmem:[%s7 + $0x20] sm:$0xff]
          %v1859 = vld [vmem:[%s7 + $0x28] sm:$0xff]
          %v1860 = vld [vmem:[%s7 + $0x30] sm:$0xff]
          %v1861 = vld [vmem:[%s7 + $0x38] sm:$0xff]
          %v1862 = vld [vmem:[%s7 + $0x40] sm:$0xff]
          %v1863 = vld [vmem:[%s7 + $0x48] sm:$0xff]
          %v1864 = vld [vmem:[%s7 + $0x50] sm:$0xff]
          %v1865 = vld [vmem:[%s7 + $0x58] sm:$0xff]
          %v1866 = vld [vmem:[%s7 + $0x60] sm:$0xff]
          %v1867 = vld [vmem:[%s7 + $0x68] sm:$0xff]
          %v1868 = vld [vmem:[%s7 + $0x70] sm:$0xff]
          %v1869 = vld [vmem:[%s7 + $0x78] sm:$0xff]
          %1870 = vmatprep.subr.mxu0 0.0
          %1871 = vmatpush1.msra.mxu0 %v1854
          %1872 = vmatprep.subr.mxu0 0.0
          %1873 = vmatpush1.msra.mxu0 %v1855
          %1874 = vmatprep.subr.mxu0 0.0
          %1875 = vmatpush1.msra.mxu0 %v1856
          %1876 = vmatprep.subr.mxu0 0.0
          %1877 = vmatpush1.msra.mxu0 %v1857
          %1878 = vmatprep.subr.mxu0 0.0
          %1879 = vmatpush1.msra.mxu0 %v1858
          %1880 = vmatprep.subr.mxu0 0.0
          %1881 = vmatpush1.msra.mxu0 %v1859
          %1882 = vmatprep.subr.mxu0 0.0
          %1883 = vmatpush1.msra.mxu0 %v1860
          %1884 = vmatprep.subr.mxu0 0.0
          %1885 = vmatpush1.msra.mxu0 %v1861
          %1886 = vmatprep.subr.mxu0 0.0
          %1887 = vmatpush1.msra.mxu0 %v1862
          %1888 = vmatprep.subr.mxu0 0.0
          %1889 = vmatpush1.msra.mxu0 %v1863
          %1890 = vmatprep.subr.mxu0 0.0
          %1891 = vmatpush1.msra.mxu0 %v1864
          %1892 = vmatprep.subr.mxu0 0.0
          %1893 = vmatpush1.msra.mxu0 %v1865
          %1894 = vmatprep.subr.mxu0 0.0
          %1895 = vmatpush1.msra.mxu0 %v1866
          %1896 = vmatprep.subr.mxu0 0.0
          %1897 = vmatpush1.msra.mxu0 %v1867
          %1898 = vmatprep.subr.mxu0 0.0
          %1899 = vmatpush1.msra.mxu0 %v1868
          %1900 = vmatprep.subr.mxu0 0.0
          %1901 = vmatpush1.msra.mxu0 %v1869
          %1902 = vmatprep.subr.mxu0 0.0
          %1903 = vmatpush1.msra.mxu0 0.0
          %1904 = vmatprep.subr.mxu0 0.0
          %1905 = vmatpush1.msra.mxu0 0.0
          %1906 = vmatprep.subr.mxu0 0.0
          %1907 = vmatpush1.msra.mxu0 0.0
          %1908 = vmatprep.subr.mxu0 0.0
          %1909 = vmatpush1.msra.mxu0 0.0
          %1910 = vmatprep.subr.mxu0 0.0
          %1911 = vmatpush1.msra.mxu0 0.0
          %1912 = vmatprep.subr.mxu0 0.0
          %1913 = vmatpush1.msra.mxu0 0.0
          %1914 = vmatprep.subr.mxu0 0.0
          %1915 = vmatpush1.msra.mxu0 0.0
          %1916 = vmatprep.subr.mxu0 0.0
          %1917 = vmatpush1.msra.mxu0 0.0
          %1918 = vmatprep.subr.mxu0 0.0
          %1919 = vmatpush1.msra.mxu0 0.0
          %1920 = vmatprep.subr.mxu0 0.0
          %1921 = vmatpush1.msra.mxu0 0.0
          %1922 = vmatprep.subr.mxu0 0.0
          %1923 = vmatpush1.msra.mxu0 0.0
          %1924 = vmatprep.subr.mxu0 0.0
          %1925 = vmatpush1.msra.mxu0 0.0
          %1926 = vmatprep.subr.mxu0 0.0
          %1927 = vmatpush1.msra.mxu0 0.0
          %1928 = vmatprep.subr.mxu0 0.0
          %1929 = vmatpush1.msra.mxu0 0.0
          %1930 = vmatprep.subr.mxu0 0.0
          %1931 = vmatpush1.msra.mxu0 0.0
          %1932 = vmatprep.subr.mxu0 0.0
          %1933 = vmatpush1.msra.mxu0 0.0
          %1934 = vmatprep.mubr.f32.mxu0 0.0
          %1935 = vmatmul.mubr.f32.gmra.mrb[0].mxu0 %v1670
          %v1936 = vpop.f32.mrb[0].mxu0
          %v1937 = vadd.f32 0.0, %v1936
          %v1938 = vpop.f32.mrb[0].mxu0
          %1939 = vmatprep.mubr.f32.mxu0 0.0
          %1940 = vmatmul.mubr.f32.gmra.mrb[0].mxu0 %v1671
          %v1941 = vpop.f32.mrb[0].mxu0
          %v1942 = vadd.f32 0.0, %v1941
          %v1943 = vpop.f32.mrb[0].mxu0
          %1944 = vdwg.mxu0
          %1945 = vmatprep.subr.mxu0 0.0
          %1946 = vmatpush1.xpose.msra.mxu0 %v1846
          %1947 = vmatprep.subr.mxu0 0.0
          %1948 = vmatpush1.xpose.msra.mxu0 0.0
          %1949 = vmatprep.subr.mxu0 0.0
          %1950 = vmatpush1.xpose.msra.mxu0 0.0
          %1951 = vmatprep.subr.mxu0 0.0
          %1952 = vmatpush1.xpose.msra.mxu0 0.0
          %1953 = vmatprep.subr.mxu0 0.0
          %1954 = vmatpush1.xpose.msra.mxu0 0.0
          %1955 = vmatprep.subr.mxu0 0.0
          %1956 = vmatpush1.xpose.msra.mxu0 0.0
          %1957 = vmatprep.subr.mxu0 0.0
          %1958 = vmatpush1.xpose.msra.mxu0 0.0
          %1959 = vmatprep.subr.mxu0 0.0
          %1960 = vmatpush1.xpose.msra.mxu0 0.0
          %1961 = vmatprep.subr.mxu0 0.0
          %1962 = vmatpush1.xpose.msra.mxu0 0.0
          %1963 = vmatprep.subr.mxu0 0.0
          %1964 = vmatpush1.xpose.msra.mxu0 0.0
          %1965 = vmatprep.subr.mxu0 0.0
          %1966 = vmatpush1.xpose.msra.mxu0 0.0
          %1967 = vmatprep.subr.mxu0 0.0
          %1968 = vmatpush1.xpose.msra.mxu0 0.0
          %1969 = vmatprep.subr.mxu0 0.0
          %1970 = vmatpush1.xpose.msra.mxu0 0.0
          %1971 = vmatprep.subr.mxu0 0.0
          %1972 = vmatpush1.xpose.msra.mxu0 0.0
          %1973 = vmatprep.subr.mxu0 0.0
          %1974 = vmatpush1.xpose.msra.mxu0 0.0
          %1975 = vmatprep.subr.mxu0 0.0
          %1976 = vmatpush1.xpose.msra.mxu0 0.0
          %1977 = vmatprep.subr.mxu0 0.0
          %1978 = vmatpush1.xpose.msra.mxu0 0.0
          %1979 = vmatprep.subr.mxu0 0.0
          %1980 = vmatpush1.xpose.msra.mxu0 0.0
          %1981 = vmatprep.subr.mxu0 0.0
          %1982 = vmatpush1.xpose.msra.mxu0 0.0
          %1983 = vmatprep.subr.mxu0 0.0
          %1984 = vmatpush1.xpose.msra.mxu0 0.0
          %1985 = vmatprep.subr.mxu0 0.0
          %1986 = vmatpush1.xpose.msra.mxu0 0.0
          %1987 = vmatprep.subr.mxu0 0.0
          %1988 = vmatpush1.xpose.msra.mxu0 0.0
          %1989 = vmatprep.subr.mxu0 0.0
          %1990 = vmatpush1.xpose.msra.mxu0 0.0
          %1991 = vmatprep.subr.mxu0 0.0
          %1992 = vmatpush1.xpose.msra.mxu0 0.0
          %1993 = vmatprep.subr.mxu0 0.0
          %1994 = vmatpush1.xpose.msra.mxu0 0.0
          %1995 = vmatprep.subr.mxu0 0.0
          %1996 = vmatpush1.xpose.msra.mxu0 0.0
          %1997 = vmatprep.subr.mxu0 0.0
          %1998 = vmatpush1.xpose.msra.mxu0 0.0
          %1999 = vmatprep.subr.mxu0 0.0
          %2000 = vmatpush1.xpose.msra.mxu0 0.0
          %2001 = vmatprep.subr.mxu0 0.0
          %2002 = vmatpush1.xpose.msra.mxu0 0.0
          %2003 = vmatprep.subr.mxu0 0.0
          %2004 = vmatpush1.xpose.msra.mxu0 0.0
          %2005 = vmatprep.subr.mxu0 0.0
          %2006 = vmatpush1.xpose.msra.mxu0 0.0
          %2007 = vmatprep.subr.mxu0 0.0
          %2008 = vmatpush1.xpose.msra.mxu0 0.0
          %2009 = vmatprep.mubr.f32.mxu0 0.0
          %2010 = vmatmul.mubr.f32.gmra.mrb[0].mxu0 %v1755
          %v2011 = vpop.f32.mrb[0].mxu0
          %v2012 = vadd.f32 0.0, %v2011
          %v2013 = vpop.f32.mrb[0].mxu0
          %2014 = vdwg.mxu0
          %2015 = vmatprep.subr.mxu0 0.0
          %2016 = vmatpush1.xpose.msra.mxu0 %v1851
          %2017 = vmatprep.subr.mxu0 0.0
          %2018 = vmatpush1.xpose.msra.mxu0 0.0
          %2019 = vmatprep.subr.mxu0 0.0
          %2020 = vmatpush1.xpose.msra.mxu0 0.0
          %2021 = vmatprep.subr.mxu0 0.0
          %2022 = vmatpush1.xpose.msra.mxu0 0.0
          %2023 = vmatprep.subr.mxu0 0.0
          %2024 = vmatpush1.xpose.msra.mxu0 0.0
          %2025 = vmatprep.subr.mxu0 0.0
          %2026 = vmatpush1.xpose.msra.mxu0 0.0
          %2027 = vmatprep.subr.mxu0 0.0
          %2028 = vmatpush1.xpose.msra.mxu0 0.0
          %2029 = vmatprep.subr.mxu0 0.0
          %2030 = vmatpush1.xpose.msra.mxu0 0.0
          %2031 = vmatprep.subr.mxu0 0.0
          %2032 = vmatpush1.xpose.msra.mxu0 0.0
          %2033 = vmatprep.subr.mxu0 0.0
          %2034 = vmatpush1.xpose.msra.mxu0 0.0
          %2035 = vmatprep.subr.mxu0 0.0
          %2036 = vmatpush1.xpose.msra.mxu0 0.0
          %2037 = vmatprep.subr.mxu0 0.0
          %2038 = vmatpush1.xpose.msra.mxu0 0.0
          %2039 = vmatprep.subr.mxu0 0.0
          %2040 = vmatpush1.xpose.msra.mxu0 0.0
          %2041 = vmatprep.subr.mxu0 0.0
          %2042 = vmatpush1.xpose.msra.mxu0 0.0
          %2043 = vmatprep.subr.mxu0 0.0
          %2044 = vmatpush1.xpose.msra.mxu0 0.0
          %2045 = vmatprep.subr.mxu0 0.0
          %2046 = vmatpush1.xpose.msra.mxu0 0.0
          %2047 = vmatprep.subr.mxu0 0.0
          %2048 = vmatpush1.xpose.msra.mxu0 0.0
          %2049 = vmatprep.subr.mxu0 0.0
          %2050 = vmatpush1.xpose.msra.mxu0 0.0
          %2051 = vmatprep.subr.mxu0 0.0
          %2052 = vmatpush1.xpose.msra.mxu0 0.0
          %2053 = vmatprep.subr.mxu0 0.0
          %2054 = vmatpush1.xpose.msra.mxu0 0.0
          %2055 = vmatprep.subr.mxu0 0.0
          %2056 = vmatpush1.xpose.msra.mxu0 0.0
          %2057 = vmatprep.subr.mxu0 0.0
          %2058 = vmatpush1.xpose.msra.mxu0 0.0
          %2059 = vmatprep.subr.mxu0 0.0
          %2060 = vmatpush1.xpose.msra.mxu0 0.0
          %2061 = vmatprep.subr.mxu0 0.0
          %2062 = vmatpush1.xpose.msra.mxu0 0.0
          %2063 = vmatprep.subr.mxu0 0.0
          %2064 = vmatpush1.xpose.msra.mxu0 0.0
          %2065 = vmatprep.subr.mxu0 0.0
          %2066 = vmatpush1.xpose.msra.mxu0 0.0
          %2067 = vmatprep.subr.mxu0 0.0
          %2068 = vmatpush1.xpose.msra.mxu0 0.0
          %2069 = vmatprep.subr.mxu0 0.0
          %2070 = vmatpush1.xpose.msra.mxu0 0.0
          %2071 = vmatprep.subr.mxu0 0.0
          %2072 = vmatpush1.xpose.msra.mxu0 0.0
          %2073 = vmatprep.subr.mxu0 0.0
          %2074 = vmatpush1.xpose.msra.mxu0 0.0
          %2075 = vmatprep.subr.mxu0 0.0
          %2076 = vmatpush1.xpose.msra.mxu0 0.0
          %2077 = vmatprep.subr.mxu0 0.0
          %2078 = vmatpush1.xpose.msra.mxu0 0.0
          %2079 = vmatprep.mubr.f32.mxu0 0.0
          %2080 = vmatmul.mubr.f32.gmra.mrb[0].mxu0 %v1760
          %v2081 = vpop.f32.mrb[0].mxu0
          %v2082 = vadd.f32 0.0, %v2081
          %v2083 = vpop.f32.mrb[0].mxu0
          %2084 = vdwg.mxu0
          %v2085 = vsel %vm1311, %v2012, -inf
          %2086 = vmax.xlane.f32.xlu0 %v2085
          %v2087 = vpop.xlane.xlu0 %2086
          %v2088 = vsel %vm1311, %v2082, -inf
          %2089 = vmax.xlane.f32.xlu0 %v2088
          %v2090 = vpop.xlane.xlu0 %2089
          %v2091 = vsub.f32 %v2012, %v2087
          %v2092 = vsub.f32 %v2082, %v2090
          %v2093 = vmul.f32 %v2091, 1.442695
          %v2094 = vpow.pop %v2093
          %v2095 = vmul.f32 %v2092, 1.442695
          %v2096 = vpow.pop %v2095
          %v2097 = vsel %vm1311, %v2094, 0.0
          %2098 = vadd.xlane.f32.xlu0 %v2097
          %v2099 = vpop.xlane.xlu0 %2098
          %v2100 = vsel %vm1311, %v2096, 0.0
          %2101 = vadd.xlane.f32.xlu0 %v2100
          %v2102 = vpop.xlane.xlu0 %2101
          %v2103 = vrcp.pop %v2099
          %v2104 = vrcp.pop %v2102
          %v2105 = vmul.f32 %v2094, %v2103
          %v2106 = vmul.f32 %v2096, %v2104
          %v2108 = vsel %vm1311, %v2105, 0
          %2110 = vmatprep.subr.mxu0 0.0
          %2111 = vmatpush1.msra.mxu0 %v1937
          %2112 = vmatprep.subr.mxu0 0.0
          %2113 = vmatpush1.msra.mxu0 0.0
          %2114 = vmatprep.subr.mxu0 0.0
          %2115 = vmatpush1.msra.mxu0 0.0
          %2116 = vmatprep.subr.mxu0 0.0
          %2117 = vmatpush1.msra.mxu0 0.0
          %2118 = vmatprep.subr.mxu0 0.0
          %2119 = vmatpush1.msra.mxu0 0.0
          %2120 = vmatprep.subr.mxu0 0.0
          %2121 = vmatpush1.msra.mxu0 0.0
          %2122 = vmatprep.subr.mxu0 0.0
          %2123 = vmatpush1.msra.mxu0 0.0
          %2124 = vmatprep.subr.mxu0 0.0
          %2125 = vmatpush1.msra.mxu0 0.0
          %2126 = vmatprep.subr.mxu0 0.0
          %2127 = vmatpush1.msra.mxu0 0.0
          %2128 = vmatprep.subr.mxu0 0.0
          %2129 = vmatpush1.msra.mxu0 0.0
          %2130 = vmatprep.subr.mxu0 0.0
          %2131 = vmatpush1.msra.mxu0 0.0
          %2132 = vmatprep.subr.mxu0 0.0
          %2133 = vmatpush1.msra.mxu0 0.0
          %2134 = vmatprep.subr.mxu0 0.0
          %2135 = vmatpush1.msra.mxu0 0.0
          %2136 = vmatprep.subr.mxu0 0.0
          %2137 = vmatpush1.msra.mxu0 0.0
          %2138 = vmatprep.subr.mxu0 0.0
          %2139 = vmatpush1.msra.mxu0 0.0
          %2140 = vmatprep.subr.mxu0 0.0
          %2141 = vmatpush1.msra.mxu0 0.0
          %2142 = vmatprep.subr.mxu0 0.0
          %2143 = vmatpush1.msra.mxu0 0.0
          %2144 = vmatprep.subr.mxu0 0.0
          %2145 = vmatpush1.msra.mxu0 0.0
          %2146 = vmatprep.subr.mxu0 0.0
          %2147 = vmatpush1.msra.mxu0 0.0
          %2148 = vmatprep.subr.mxu0 0.0
          %2149 = vmatpush1.msra.mxu0 0.0
          %2150 = vmatprep.subr.mxu0 0.0
          %2151 = vmatpush1.msra.mxu0 0.0
          %2152 = vmatprep.subr.mxu0 0.0
          %2153 = vmatpush1.msra.mxu0 0.0
          %2154 = vmatprep.subr.mxu0 0.0
          %2155 = vmatpush1.msra.mxu0 0.0
          %2156 = vmatprep.subr.mxu0 0.0
          %2157 = vmatpush1.msra.mxu0 0.0
          %2158 = vmatprep.subr.mxu0 0.0
          %2159 = vmatpush1.msra.mxu0 0.0
          %2160 = vmatprep.subr.mxu0 0.0
          %2161 = vmatpush1.msra.mxu0 0.0
          %2162 = vmatprep.subr.mxu0 0.0
          %2163 = vmatpush1.msra.mxu0 0.0
          %2164 = vmatprep.subr.mxu0 0.0
          %2165 = vmatpush1.msra.mxu0 0.0
          %2166 = vmatprep.subr.mxu0 0.0
          %2167 = vmatpush1.msra.mxu0 0.0
          %2168 = vmatprep.subr.mxu0 0.0
          %2169 = vmatpush1.msra.mxu0 0.0
          %2170 = vmatprep.subr.mxu0 0.0
          %2171 = vmatpush1.msra.mxu0 0.0
          %2172 = vmatprep.subr.mxu0 0.0
          %2173 = vmatpush1.msra.mxu0 0.0
          %2174 = vmatprep.mubr.f32.mxu0 0.0
          %2175 = vmatmul.mubr.f32.gmra.mrb[0].mxu0 %v2108
          %v2176 = vpop.f32.mrb[0].mxu0
          %v2177 = vadd.f32 0.0, %v2176
          %v2178 = vpop.f32.mrb[0].mxu0
          %2179 = vdwg.mxu0
          %v2181 = vsel %vm1311, %v2106, 0
          %2183 = vmatprep.subr.mxu0 0.0
          %2184 = vmatpush1.msra.mxu0 %v1942
          %2185 = vmatprep.subr.mxu0 0.0
          %2186 = vmatpush1.msra.mxu0 0.0
          %2187 = vmatprep.subr.mxu0 0.0
          %2188 = vmatpush1.msra.mxu0 0.0
          %2189 = vmatprep.subr.mxu0 0.0
          %2190 = vmatpush1.msra.mxu0 0.0
          %2191 = vmatprep.subr.mxu0 0.0
          %2192 = vmatpush1.msra.mxu0 0.0
          %2193 = vmatprep.subr.mxu0 0.0
          %2194 = vmatpush1.msra.mxu0 0.0
          %2195 = vmatprep.subr.mxu0 0.0
          %2196 = vmatpush1.msra.mxu0 0.0
          %2197 = vmatprep.subr.mxu0 0.0
          %2198 = vmatpush1.msra.mxu0 0.0
          %2199 = vmatprep.subr.mxu0 0.0
          %2200 = vmatpush1.msra.mxu0 0.0
          %2201 = vmatprep.subr.mxu0 0.0
          %2202 = vmatpush1.msra.mxu0 0.0
          %2203 = vmatprep.subr.mxu0 0.0
          %2204 = vmatpush1.msra.mxu0 0.0
          %2205 = vmatprep.subr.mxu0 0.0
          %2206 = vmatpush1.msra.mxu0 0.0
          %2207 = vmatprep.subr.mxu0 0.0
          %2208 = vmatpush1.msra.mxu0 0.0
          %2209 = vmatprep.subr.mxu0 0.0
          %2210 = vmatpush1.msra.mxu0 0.0
          %2211 = vmatprep.subr.mxu0 0.0
          %2212 = vmatpush1.msra.mxu0 0.0
          %2213 = vmatprep.subr.mxu0 0.0
          %2214 = vmatpush1.msra.mxu0 0.0
          %2215 = vmatprep.subr.mxu0 0.0
          %2216 = vmatpush1.msra.mxu0 0.0
          %2217 = vmatprep.subr.mxu0 0.0
          %2218 = vmatpush1.msra.mxu0 0.0
          %2219 = vmatprep.subr.mxu0 0.0
          %2220 = vmatpush1.msra.mxu0 0.0
          %2221 = vmatprep.subr.mxu0 0.0
          %2222 = vmatpush1.msra.mxu0 0.0
          %2223 = vmatprep.subr.mxu0 0.0
          %2224 = vmatpush1.msra.mxu0 0.0
          %2225 = vmatprep.subr.mxu0 0.0
          %2226 = vmatpush1.msra.mxu0 0.0
          %2227 = vmatprep.subr.mxu0 0.0
          %2228 = vmatpush1.msra.mxu0 0.0
          %2229 = vmatprep.subr.mxu0 0.0
          %2230 = vmatpush1.msra.mxu0 0.0
          %2231 = vmatprep.subr.mxu0 0.0
          %2232 = vmatpush1.msra.mxu0 0.0
          %2233 = vmatprep.subr.mxu0 0.0
          %2234 = vmatpush1.msra.mxu0 0.0
          %2235 = vmatprep.subr.mxu0 0.0
          %2236 = vmatpush1.msra.mxu0 0.0
          %2237 = vmatprep.subr.mxu0 0.0
          %2238 = vmatpush1.msra.mxu0 0.0
          %2239 = vmatprep.subr.mxu0 0.0
          %2240 = vmatpush1.msra.mxu0 0.0
          %2241 = vmatprep.subr.mxu0 0.0
          %2242 = vmatpush1.msra.mxu0 0.0
          %2243 = vmatprep.subr.mxu0 0.0
          %2244 = vmatpush1.msra.mxu0 0.0
          %2245 = vmatprep.subr.mxu0 0.0
          %2246 = vmatpush1.msra.mxu0 0.0
          %2247 = vmatprep.mubr.f32.mxu0 0.0
          %2248 = vmatmul.mubr.f32.gmra.mrb[0].mxu0 %v2181
          %v2249 = vpop.f32.mrb[0].mxu0
          %v2250 = vadd.f32 0.0, %v2249
          %v2251 = vpop.f32.mrb[0].mxu0
          %2252 = vdwg.mxu0
          %v2253 = vrot.slane %v2177, 4
          %v2254 = vadd.f32 %v2177, %v2253
          %v2255 = vrot.slane %v2254, 2
          %v2256 = vadd.f32 %v2254, %v2255
          %v2257 = vrot.slane %v2256, 1
          %v2258 = vadd.f32 %v2256, %v2257
          %v2259 = vrot.slane %v2250, 4
          %v2260 = vadd.f32 %v2250, %v2259
          %v2261 = vrot.slane %v2260, 2
          %v2262 = vadd.f32 %v2260, %v2261
          %v2263 = vrot.slane %v2262, 1
          %v2264 = vadd.f32 %v2262, %v2263
          %v2265 = vmul.f32 %v2258, 0.125
          %v2266 = vmul.f32 %v2264, 0.125
          %v2267 = vld [vmem:[%s8] sm:$0xff]
          %v2268 = vld [vmem:[%s8 + $0x8] sm:$0xff]
          %v2269 = vld [vmem:[%s8 + $0x10] sm:$0xff]
          %v2270 = vld [vmem:[%s8 + $0x18] sm:$0xff]
          %v2271 = vld [vmem:[%s8 + $0x20] sm:$0xff]
          %v2272 = vld [vmem:[%s8 + $0x28] sm:$0xff]
          %v2273 = vld [vmem:[%s8 + $0x30] sm:$0xff]
          %v2274 = vld [vmem:[%s8 + $0x38] sm:$0xff]
          %v2275 = vld [vmem:[%s8 + $0x40] sm:$0xff]
          %v2276 = vld [vmem:[%s8 + $0x48] sm:$0xff]
          %v2277 = vld [vmem:[%s8 + $0x50] sm:$0xff]
          %v2278 = vld [vmem:[%s8 + $0x58] sm:$0xff]
          %v2279 = vld [vmem:[%s8 + $0x60] sm:$0xff]
          %v2280 = vld [vmem:[%s8 + $0x68] sm:$0xff]
          %v2281 = vld [vmem:[%s8 + $0x70] sm:$0xff]
          %v2282 = vld [vmem:[%s8 + $0x78] sm:$0xff]
          %v2283 = vld [vmem:[%s9] sm:$0x1]
          %v2285 = vlaneseq
          %v2286 = vshrl.u32 %v2285, 7
          %v2287 = vsub.s32 0, %v2286
          %v2288 = vrot.slane %v2283, %v2287
          %vm2292 = vcmask 1041409
          %v2293 = vsel %vm2292, %v2266, %v2265
          %2295 = vmatprep.subr.mxu0 0.0
          %2296 = vmatpush1.msra.mxu0 %v2267
          %2297 = vmatprep.subr.mxu0 0.0
          %2298 = vmatpush1.msra.mxu0 %v2268
          %2299 = vmatprep.subr.mxu0 0.0
          %2300 = vmatpush1.msra.mxu0 %v2269
          %2301 = vmatprep.subr.mxu0 0.0
          %2302 = vmatpush1.msra.mxu0 %v2270
          %2303 = vmatprep.subr.mxu0 0.0
          %2304 = vmatpush1.msra.mxu0 %v2271
          %2305 = vmatprep.subr.mxu0 0.0
          %2306 = vmatpush1.msra.mxu0 %v2272
          %2307 = vmatprep.subr.mxu0 0.0
          %2308 = vmatpush1.msra.mxu0 %v2273
          %2309 = vmatprep.subr.mxu0 0.0
          %2310 = vmatpush1.msra.mxu0 %v2274
          %2311 = vmatprep.subr.mxu0 0.0
          %2312 = vmatpush1.msra.mxu0 %v2275
          %2313 = vmatprep.subr.mxu0 0.0
          %2314 = vmatpush1.msra.mxu0 %v2276
          %2315 = vmatprep.subr.mxu0 0.0
          %2316 = vmatpush1.msra.mxu0 %v2277
          %2317 = vmatprep.subr.mxu0 0.0
          %2318 = vmatpush1.msra.mxu0 %v2278
          %2319 = vmatprep.subr.mxu0 0.0
          %2320 = vmatpush1.msra.mxu0 %v2279
          %2321 = vmatprep.subr.mxu0 0.0
          %2322 = vmatpush1.msra.mxu0 %v2280
          %2323 = vmatprep.subr.mxu0 0.0
          %2324 = vmatpush1.msra.mxu0 %v2281
          %2325 = vmatprep.subr.mxu0 0.0
          %2326 = vmatpush1.msra.mxu0 %v2282
          %2327 = vmatprep.subr.mxu0 0.0
          %2328 = vmatpush1.msra.mxu0 0.0
          %2329 = vmatprep.subr.mxu0 0.0
          %2330 = vmatpush1.msra.mxu0 0.0
          %2331 = vmatprep.subr.mxu0 0.0
          %2332 = vmatpush1.msra.mxu0 0.0
          %2333 = vmatprep.subr.mxu0 0.0
          %2334 = vmatpush1.msra.mxu0 0.0
          %2335 = vmatprep.subr.mxu0 0.0
          %2336 = vmatpush1.msra.mxu0 0.0
          %2337 = vmatprep.subr.mxu0 0.0
          %2338 = vmatpush1.msra.mxu0 0.0
          %2339 = vmatprep.subr.mxu0 0.0
          %2340 = vmatpush1.msra.mxu0 0.0
          %2341 = vmatprep.subr.mxu0 0.0
          %2342 = vmatpush1.msra.mxu0 0.0
          %2343 = vmatprep.subr.mxu0 0.0
          %2344 = vmatpush1.msra.mxu0 0.0
          %2345 = vmatprep.subr.mxu0 0.0
          %2346 = vmatpush1.msra.mxu0 0.0
          %2347 = vmatprep.subr.mxu0 0.0
          %2348 = vmatpush1.msra.mxu0 0.0
          %2349 = vmatprep.subr.mxu0 0.0
          %2350 = vmatpush1.msra.mxu0 0.0
          %2351 = vmatprep.subr.mxu0 0.0
          %2352 = vmatpush1.msra.mxu0 0.0
          %2353 = vmatprep.subr.mxu0 0.0
          %2354 = vmatpush1.msra.mxu0 0.0
          %2355 = vmatprep.subr.mxu0 0.0
          %2356 = vmatpush1.msra.mxu0 0.0
          %2357 = vmatprep.subr.mxu0 0.0
          %2358 = vmatpush1.msra.mxu0 0.0
          %2359 = vmatprep.mubr.f32.mxu0 0.0
          %2360 = vmatmul.mubr.f32.gmra.mrb[0].mxu0 %v2293
          %v2361 = vpop.f32.mrb[0].mxu0
          %v2362 = vadd.f32 %v2288, %v2361
          %v2363 = vpop.f32.mrb[0].mxu0
          %2364 = vdwg.mxu0
          %2365 = vst [vmem:[#allocation9] sm:$0x3] %v2362
        $region104: #{unified_model_forward.1} parent=83 // pred_fallthru
          _
        // Predicated region
        $region105: #{unified_model_forward.1} parent=83 // pred_check
          %p2366 = pneg %p387
        $region106: #{unified_model_forward.1} parent=83 // pred_check_branch
          %2368 = sbr.rel (%p2366) target = $region108
        $region107: #{unified_model_forward.1} parent=83 // pred_region
          %s2370 = ssub.s32 32, 32
          %2371 = vsyncadd [#allocation5], %s2370
          %s2373 = sshll.u32 [#allocation9], 4
          %s2374 = int_to_ptr.vmem [resolvable:$true] %s2373
          %2376 = dma.vmem_to_hbm [thread:$0]  %s2374, 32, %s16, [#allocation5]
        $region108: #{unified_model_forward.1} parent=83 // pred_fallthru
          _
        // Predicated region
        $region109: #{unified_model_forward.1} parent=83 // pred_check
          %p2377 = pneg %p408
        $region110: #{unified_model_forward.1} parent=83 // pred_check_branch
          %2379 = sbr.rel (%p2377) target = $region112
        $region111: #{unified_model_forward.1} parent=83 // pred_region
          %s2381 = ssub.s32 32, 32
          %2382 = vsyncadd [#allocation11], %s2381
          %s2384 = sshll.u32 [#allocation10], 4
          %s2385 = int_to_ptr.vmem [resolvable:$true] %s2384
          %2387 = dma.vmem_to_hbm [thread:$0]  %s2385, 32, %s17, [#allocation11]
        $region112: #{unified_model_forward.1} parent=83 // pred_fallthru
          _
        // Predicated region
        $region113: #{unified_model_forward.1} parent=83 // pred_check
          %p2388 = pneg %p387
        $region114: #{unified_model_forward.1} parent=83 // pred_check_branch
          %2390 = sbr.rel (%p2388) target = $region116
        $region115: #{unified_model_forward.1} parent=83 // pred_region
          %2391 = dma.done [#allocation5], 32
        $region116: #{unified_model_forward.1} parent=83 // pred_fallthru
          _
        // Predicated region
        $region117: #{unified_model_forward.1} parent=83 // pred_check
          %p2392 = pneg %p408
        $region118: #{unified_model_forward.1} parent=83 // pred_check_branch
          %2394 = sbr.rel (%p2392) target = $region120
        $region119: #{unified_model_forward.1} parent=83 // pred_region
          %2395 = dma.done [#allocation11], 32
        $region120: #{unified_model_forward.1} parent=83 // pred_fallthru
          _
      $region84: #{unified_model_forward.1} parent=5 // pred_fallthru
        _
      %p2396 = scmp.le.s32.totalorder 2, %s28
      // Predicated region
      $region121: #{unified_model_forward.1} parent=5 // pred_check
        %p2397 = pneg %p2396
      $region122: #{unified_model_forward.1} parent=5 // pred_check_branch
        %2399 = sbr.rel (%p2397) target = $region124
      $region123: #{unified_model_forward.1} parent=5 // pred_region
        %s2400 = ssub.s32 %s28, 2
      $region124: #{unified_model_forward.1} parent=5 // pred_fallthru
        _
    $region6: #{unified_model_forward.1} parent=1 // loop_footer
      %s32 = sadd.s32 1, %s28
    $region7: #{unified_model_forward.1} parent=1 // loop_footer_branch
      %27 = sbr.rel target = $region3
    $region8: #{unified_model_forward.1} parent=1 // loop_exit
      _
    %2401 = vsyncpa [#allocation4], 1
    %s2402 = scalar_lea.sflag [#allocation4], 1
    %2403 = vsyncpa %s2402, 1
    %2404 = vsyncpa [#allocation7], 1
    %2405 = vsyncpa [#allocation5], 1
    %s2406 = scalar_lea.sflag [#allocation5], 1
    %2407 = vsyncpa %s2406, 1
    %2408 = vsyncpa [#allocation11], 1

</llo_original>
